<compile_context>
chip_gen: v5e
topology: v5e:2x2
jax: 0.10.0
libtpu: 0.0.40
codegen_flags: <defaults>
</compile_context>

<pallas_src>
import jax
import jax.numpy as jnp
from jax.experimental import pallas as pl
from jax.experimental.pallas import tpu as pltpu

EPS = 1e-5
OUT_PAD = 128          # lane-dense padded width of the final (512, 2) layer
H1 = 64                # logical first hidden width (PyTorch module)
H1P = 128              # lane-padded first hidden width used inside the kernel
H2, H3 = 512, 512


def _mlp_kernel(x_ref, w1_ref, w2_ref, w3_ref, w4_ref, vec_ref, o_ref):
    # Packed per-feature vectors: rows = [g1, be1, g2, be2, g3, be3, b4_pad, 0]
    vec = vec_ref[...]                                   # (8, 512) f32
    g1, be1 = vec[0:1, 0:H1P], vec[1:2, 0:H1P]           # padded lanes are 0
    g2, be2 = vec[2:3, :], vec[3:4, :]
    g3, be3 = vec[4:5, :], vec[5:6, :]
    b4 = vec[6:7, 0:OUT_PAD]

    def bn_relu(h, gamma, beta):
        # BatchNorm1d (training mode): full-batch mean + biased variance, f32 math.
        # One-pass stats (E[x^2] - mean^2, clamped) + fused affine scale/shift.
        mean = jnp.mean(h, axis=0, keepdims=True)
        mean_sq = jnp.mean(h * h, axis=0, keepdims=True)
        var = jnp.maximum(mean_sq - mean * mean, 0.0)
        scale = gamma * jax.lax.rsqrt(var + EPS)         # (1, F)
        shift = beta - mean * scale                      # (1, F)
        return jnp.maximum(h * scale + shift, 0.0)       # 3 VALU ops per element

    x = x_ref[...].astype(jnp.float32)                   # (N, 3)
    w1 = w1_ref[...]                                     # (3, 128) f32, lanes>=64 are 0

    # Layer 1 on the VPU: K=3 would massively underfill the MXU systolic array.
    h = (x[:, 0:1] * w1[0:1, :]
         + x[:, 1:2] * w1[1:2, :]
         + x[:, 2:3] * w1[2:3, :])                       # (N, 128) f32, full-vreg
    h = bn_relu(h, g1, be1)                              # bias b1 cancelled by BN
                                                         # padded cols stay exactly 0

    h = jnp.dot(h.astype(w2_ref.dtype), w2_ref[...],
                preferred_element_type=jnp.float32)      # (N, 512); zero rows of w2
    h = bn_relu(h, g2, be2)                              # meet the zero h columns

    h = jnp.dot(h.astype(w3_ref.dtype), w3_ref[...],
                preferred_element_type=jnp.float32)      # (N, 512), f32 accum
    h = bn_relu(h, g3, be3)                              # bias b3 cancelled by BN

    out = jnp.dot(h.astype(w4_ref.dtype), w4_ref[...],
                  preferred_element_type=jnp.float32) + b4   # (N, 128) lane-dense
    o_ref[...] = out.astype(o_ref.dtype)


def linear_model_forward(x_tuple, params, *, use_bf16_weights=True):
    x0, x2 = x_tuple
    # x1 is computed (slice) but unused, mirroring the PyTorch forward.
    _x1 = x0[:, 0:-1, :, :]

    n = x2.shape[0]
    (w1, b1, g1, be1), (w2, b2, g2, be2), (w3, b3, g3, be3), (w4, b4) = params
    del b1, b2, b3  # cancelled by the following BatchNorm layers

    mm_dtype = jnp.bfloat16 if use_bf16_weights else jnp.float32
    out_dtype = jnp.bfloat16 if use_bf16_weights else jnp.float32

    # Pad the first hidden dim 64 -> 128 (full-vreg layer 1 / BN1, K=128 for MXU L2).
    w1p = jnp.zeros((3, H1P), jnp.float32).at[:, :H1].set(w1.astype(jnp.float32))
    w2p = jnp.zeros((H1P, H2), jnp.float32).at[:H1, :].set(
        w2.astype(jnp.float32)).astype(mm_dtype)
    w3c = w3.astype(mm_dtype)

    # Lane-pad the final layer from 2 -> 128 output features (unmasked stores).
    w4p = jnp.zeros((H3, OUT_PAD), jnp.float32).at[:, :2].set(w4).astype(mm_dtype)
    b4p = jnp.zeros((OUT_PAD,), jnp.float32).at[:2].set(b4)

    def pad512(v):
        return jnp.zeros((512,), jnp.float32).at[: v.shape[0]].set(
            v.astype(jnp.float32))

    # Pack all small per-feature vectors into one (8, 512) array (single DMA/arg).
    # g1/be1 are zero-padded beyond lane 64 -> padded BN1 lanes produce exact zeros.
    vec = jnp.stack(
        [pad512(g1), pad512(be1),
         pad512(g2), pad512(be2),
         pad512(g3), pad512(be3),
         pad512(b4p), jnp.zeros((512,), jnp.float32)],
        axis=0)                                              # (8, 512) f32

    flops = 2 * n * (3 * H1P + H1P * H2 + H2 * H3 + H3 * OUT_PAD)
    out_itemsize = jnp.dtype(out_dtype).itemsize
    bytes_accessed = int(
        x2.size * x2.dtype.itemsize
        + w1p.size * 4
        + w2p.size * jnp.dtype(mm_dtype).itemsize
        + w3c.size * jnp.dtype(mm_dtype).itemsize
        + w4p.size * jnp.dtype(mm_dtype).itemsize
        + vec.size * 4
        + n * OUT_PAD * out_itemsize)
    cost = pl.CostEstimate(flops=flops,
                           transcendentals=H1P + H2 + H3,    # 3 rsqrt vectors
                           bytes_accessed=bytes_accessed)

    # N- and chip-aware VMEM limit (the all-resident footprint is O(N)).
    try:
        vmem_cap = int(pltpu.get_tpu_info().vmem_capacity_bytes)
    except Exception:
        vmem_cap = 64 * 1024 * 1024                          # conservative (v7x)
    # per-row peak working set: x tile + h1 f32 + two live (N,512) f32 + out slab
    per_row = 128 * 4 + H1P * 4 + 2 * H2 * 4 + OUT_PAD * out_itemsize
    vmem_needed = n * per_row + (4 << 20)                    # + weights/vec/slack
    vmem_limit = max(16 << 20, min(vmem_needed, int(0.75 * vmem_cap)))

    vmem_spec = pl.BlockSpec(memory_space=pltpu.MemorySpace.VMEM)
    out_padded = pl.pallas_call(
        _mlp_kernel,
        out_shape=jax.ShapeDtypeStruct((n, OUT_PAD), out_dtype),
        in_specs=[vmem_spec] * 6,
        out_specs=vmem_spec,
        compiler_params=pltpu.CompilerParams(vmem_limit_bytes=vmem_limit),
        cost_estimate=cost,
    )(x2, w1p, w2p, w3c, w4p, vec)

    return out_padded[:, :2].astype(jnp.float32)


def init_params(key):
    """Deterministic init matching the layer shapes of the PyTorch module.

    Linear weights/biases ~ U(-1/sqrt(fan_in), 1/sqrt(fan_in)) (PyTorch default),
    BatchNorm gamma = 1, beta = 0.  Weights stored as (in, out).
    """
    dims = [(3, 64), (64, 512), (512, 512), (512, 2)]
    params = []
    for i, (fan_in, fan_out) in enumerate(dims):
        key, kw, kb = jax.random.split(key, 3)
        bound = 1.0 / (fan_in ** 0.5)
        w = jax.random.uniform(kw, (fan_in, fan_out), jnp.float32, -bound, bound)
        b = jax.random.uniform(kb, (fan_out,), jnp.float32, -bound, bound)
        if i < 3:
            g = jnp.ones((fan_out,), jnp.float32)
            be = jnp.zeros((fan_out,), jnp.float32)
            params.append((w, b, g, be))
        else:
            params.append((w, b))
    return params


if __name__ == "__main__":
    key = jax.random.PRNGKey(0)
    k0, k2, kp = jax.random.split(key, 3)

    # x[0]: NCHW 4-D tensor (only sliced, never used downstream)
    x0 = jax.random.normal(k0, (2, 4, 16, 16), jnp.float32)
    # x[1]: (N, 3) features fed through the MLP
    x2 = jax.random.normal(k2, (8, 3), jnp.float32)

    params = init_params(kp)

    out = linear_model_forward((x0, x2), params)
    jax.block_until_ready(out)
    assert out.shape == (8, 2) and out.dtype == jnp.float32
    print("KERNEL_OK")
</pallas_src>

<mosaic_0001>
module attributes {stable_mosaic.version = 11 : i64} {
  func.func @_mlp_kernel(%arg0: memref<8x3xf32, #tpu.memory_space<vmem>>, %arg1: memref<3x128xf32, #tpu.memory_space<vmem>>, %arg2: memref<128x512xbf16, #tpu.memory_space<vmem>>, %arg3: memref<512x512xbf16, #tpu.memory_space<vmem>>, %arg4: memref<512x128xbf16, #tpu.memory_space<vmem>>, %arg5: memref<8x512xf32, #tpu.memory_space<vmem>>, %arg6: memref<8x128xbf16, #tpu.memory_space<vmem>>) attributes {dimension_semantics = [], scalar_prefetch = 0 : i64, scratch_operands = 0 : i64, tpu.core_type = #tpu.core_type<tc>} {
    %c0 = arith.constant 0 : index
    %c0_0 = arith.constant 0 : index
    %0 = vector.load %arg5[%c0, %c0_0] : memref<8x512xf32, #tpu.memory_space<vmem>>, vector<8x512xf32>
    %1 = vector.extract_strided_slice %0 {offsets = [0, 0], sizes = [1, 128], strides = [1, 1]} : vector<8x512xf32> to vector<1x128xf32>
    %2 = vector.extract_strided_slice %0 {offsets = [1, 0], sizes = [1, 128], strides = [1, 1]} : vector<8x512xf32> to vector<1x128xf32>
    %3 = vector.extract_strided_slice %0 {offsets = [2, 0], sizes = [1, 512], strides = [1, 1]} : vector<8x512xf32> to vector<1x512xf32>
    %4 = vector.extract_strided_slice %0 {offsets = [3, 0], sizes = [1, 512], strides = [1, 1]} : vector<8x512xf32> to vector<1x512xf32>
    %5 = vector.extract_strided_slice %0 {offsets = [4, 0], sizes = [1, 512], strides = [1, 1]} : vector<8x512xf32> to vector<1x512xf32>
    %6 = vector.extract_strided_slice %0 {offsets = [5, 0], sizes = [1, 512], strides = [1, 1]} : vector<8x512xf32> to vector<1x512xf32>
    %7 = vector.extract_strided_slice %0 {offsets = [6, 0], sizes = [1, 128], strides = [1, 1]} : vector<8x512xf32> to vector<1x128xf32>
    %c0_1 = arith.constant 0 : index
    %c0_2 = arith.constant 0 : index
    %8 = vector.load %arg0[%c0_1, %c0_2] : memref<8x3xf32, #tpu.memory_space<vmem>>, vector<8x3xf32>
    %c0_3 = arith.constant 0 : index
    %c0_4 = arith.constant 0 : index
    %9 = vector.load %arg1[%c0_3, %c0_4] : memref<3x128xf32, #tpu.memory_space<vmem>>, vector<3x128xf32>
    %10 = vector.extract_strided_slice %8 {offsets = [0, 0], sizes = [8, 1], strides = [1, 1]} : vector<8x3xf32> to vector<8x1xf32>
    %11 = vector.extract_strided_slice %9 {offsets = [0, 0], sizes = [1, 128], strides = [1, 1]} : vector<3x128xf32> to vector<1x128xf32>
    %12 = vector.broadcast %10 : vector<8x1xf32> to vector<8x128xf32>
    %13 = vector.broadcast %11 : vector<1x128xf32> to vector<8x128xf32>
    %14 = arith.mulf %12, %13 : vector<8x128xf32>
    %15 = vector.extract_strided_slice %8 {offsets = [0, 1], sizes = [8, 1], strides = [1, 1]} : vector<8x3xf32> to vector<8x1xf32>
    %16 = vector.extract_strided_slice %9 {offsets = [1, 0], sizes = [1, 128], strides = [1, 1]} : vector<3x128xf32> to vector<1x128xf32>
    %17 = vector.broadcast %15 : vector<8x1xf32> to vector<8x128xf32>
    %18 = vector.broadcast %16 : vector<1x128xf32> to vector<8x128xf32>
    %19 = arith.mulf %17, %18 : vector<8x128xf32>
    %20 = arith.addf %14, %19 : vector<8x128xf32>
    %21 = vector.extract_strided_slice %8 {offsets = [0, 2], sizes = [8, 1], strides = [1, 1]} : vector<8x3xf32> to vector<8x1xf32>
    %22 = vector.extract_strided_slice %9 {offsets = [2, 0], sizes = [1, 128], strides = [1, 1]} : vector<3x128xf32> to vector<1x128xf32>
    %23 = vector.broadcast %21 : vector<8x1xf32> to vector<8x128xf32>
    %24 = vector.broadcast %22 : vector<1x128xf32> to vector<8x128xf32>
    %25 = arith.mulf %23, %24 : vector<8x128xf32>
    %26 = arith.addf %20, %25 : vector<8x128xf32>
    %cst = arith.constant dense<0.000000e+00> : vector<128xf32>
    %27 = vector.multi_reduction <add>, %26, %cst [0] : vector<8x128xf32> to vector<128xf32>
    %28 = vector.shape_cast %27 : vector<128xf32> to vector<1x128xf32>
    %cst_5 = arith.constant 8.000000e+00 : f32
    %29 = vector.broadcast %cst_5 : f32 to vector<1x128xf32>
    %30 = arith.divf %28, %29 : vector<1x128xf32>
    %31 = arith.mulf %26, %26 : vector<8x128xf32>
    %cst_6 = arith.constant dense<0.000000e+00> : vector<128xf32>
    %32 = vector.multi_reduction <add>, %31, %cst_6 [0] : vector<8x128xf32> to vector<128xf32>
    %33 = vector.shape_cast %32 : vector<128xf32> to vector<1x128xf32>
    %cst_7 = arith.constant 8.000000e+00 : f32
    %34 = vector.broadcast %cst_7 : f32 to vector<1x128xf32>
    %35 = arith.divf %33, %34 : vector<1x128xf32>
    %36 = arith.mulf %30, %30 : vector<1x128xf32>
    %37 = arith.subf %35, %36 : vector<1x128xf32>
    %cst_8 = arith.constant 0.000000e+00 : f32
    %38 = vector.broadcast %cst_8 : f32 to vector<1x128xf32>
    %39 = arith.maximumf %37, %38 : vector<1x128xf32>
    %cst_9 = arith.constant 9.99999974E-6 : f32
    %40 = vector.broadcast %cst_9 : f32 to vector<1x128xf32>
    %41 = arith.addf %39, %40 : vector<1x128xf32>
    %42 = math.rsqrt %41 : vector<1x128xf32>
    %43 = arith.mulf %1, %42 : vector<1x128xf32>
    %44 = arith.mulf %30, %43 : vector<1x128xf32>
    %45 = arith.subf %2, %44 : vector<1x128xf32>
    %46 = vector.broadcast %43 : vector<1x128xf32> to vector<8x128xf32>
    %47 = arith.mulf %26, %46 : vector<8x128xf32>
    %48 = vector.broadcast %45 : vector<1x128xf32> to vector<8x128xf32>
    %49 = arith.addf %47, %48 : vector<8x128xf32>
    %cst_10 = arith.constant 0.000000e+00 : f32
    %50 = vector.broadcast %cst_10 : f32 to vector<8x128xf32>
    %51 = arith.maximumf %49, %50 : vector<8x128xf32>
    %52 = arith.truncf %51 : vector<8x128xf32> to vector<8x128xbf16>
    %c0_11 = arith.constant 0 : index
    %c0_12 = arith.constant 0 : index
    %53 = vector.load %arg2[%c0_11, %c0_12] : memref<128x512xbf16, #tpu.memory_space<vmem>>, vector<128x512xbf16>
    %cst_13 = arith.constant dense<0.000000e+00> : vector<8x512xf32>
    %54 = tpu.matmul %52, %53, %cst_13 {dimension_numbers = #tpu.dot_dimension_numbers<[1], [0], [0], [1], [0, 0, 1, 1], [], []>} : vector<8x128xbf16>, vector<128x512xbf16>, vector<8x512xf32> -> vector<8x512xf32>
    %cst_14 = arith.constant dense<0.000000e+00> : vector<512xf32>
    %55 = vector.multi_reduction <add>, %54, %cst_14 [0] : vector<8x512xf32> to vector<512xf32>
    %56 = vector.shape_cast %55 : vector<512xf32> to vector<1x512xf32>
    %cst_15 = arith.constant 8.000000e+00 : f32
    %57 = vector.broadcast %cst_15 : f32 to vector<1x512xf32>
    %58 = arith.divf %56, %57 : vector<1x512xf32>
    %59 = arith.mulf %54, %54 : vector<8x512xf32>
    %cst_16 = arith.constant dense<0.000000e+00> : vector<512xf32>
    %60 = vector.multi_reduction <add>, %59, %cst_16 [0] : vector<8x512xf32> to vector<512xf32>
    %61 = vector.shape_cast %60 : vector<512xf32> to vector<1x512xf32>
    %cst_17 = arith.constant 8.000000e+00 : f32
    %62 = vector.broadcast %cst_17 : f32 to vector<1x512xf32>
    %63 = arith.divf %61, %62 : vector<1x512xf32>
    %64 = arith.mulf %58, %58 : vector<1x512xf32>
    %65 = arith.subf %63, %64 : vector<1x512xf32>
    %cst_18 = arith.constant 0.000000e+00 : f32
    %66 = vector.broadcast %cst_18 : f32 to vector<1x512xf32>
    %67 = arith.maximumf %65, %66 : vector<1x512xf32>
    %cst_19 = arith.constant 9.99999974E-6 : f32
    %68 = vector.broadcast %cst_19 : f32 to vector<1x512xf32>
    %69 = arith.addf %67, %68 : vector<1x512xf32>
    %70 = math.rsqrt %69 : vector<1x512xf32>
    %71 = arith.mulf %3, %70 : vector<1x512xf32>
    %72 = arith.mulf %58, %71 : vector<1x512xf32>
    %73 = arith.subf %4, %72 : vector<1x512xf32>
    %74 = vector.broadcast %71 : vector<1x512xf32> to vector<8x512xf32>
    %75 = arith.mulf %54, %74 : vector<8x512xf32>
    %76 = vector.broadcast %73 : vector<1x512xf32> to vector<8x512xf32>
    %77 = arith.addf %75, %76 : vector<8x512xf32>
    %cst_20 = arith.constant 0.000000e+00 : f32
    %78 = vector.broadcast %cst_20 : f32 to vector<8x512xf32>
    %79 = arith.maximumf %77, %78 : vector<8x512xf32>
    %80 = arith.truncf %79 : vector<8x512xf32> to vector<8x512xbf16>
    %c0_21 = arith.constant 0 : index
    %c0_22 = arith.constant 0 : index
    %81 = vector.load %arg3[%c0_21, %c0_22] : memref<512x512xbf16, #tpu.memory_space<vmem>>, vector<512x512xbf16>
    %cst_23 = arith.constant dense<0.000000e+00> : vector<8x512xf32>
    %82 = tpu.matmul %80, %81, %cst_23 {dimension_numbers = #tpu.dot_dimension_numbers<[1], [0], [0], [1], [0, 0, 1, 1], [], []>} : vector<8x512xbf16>, vector<512x512xbf16>, vector<8x512xf32> -> vector<8x512xf32>
    %cst_24 = arith.constant dense<0.000000e+00> : vector<512xf32>
    %83 = vector.multi_reduction <add>, %82, %cst_24 [0] : vector<8x512xf32> to vector<512xf32>
    %84 = vector.shape_cast %83 : vector<512xf32> to vector<1x512xf32>
    %cst_25 = arith.constant 8.000000e+00 : f32
    %85 = vector.broadcast %cst_25 : f32 to vector<1x512xf32>
    %86 = arith.divf %84, %85 : vector<1x512xf32>
    %87 = arith.mulf %82, %82 : vector<8x512xf32>
    %cst_26 = arith.constant dense<0.000000e+00> : vector<512xf32>
    %88 = vector.multi_reduction <add>, %87, %cst_26 [0] : vector<8x512xf32> to vector<512xf32>
    %89 = vector.shape_cast %88 : vector<512xf32> to vector<1x512xf32>
    %cst_27 = arith.constant 8.000000e+00 : f32
    %90 = vector.broadcast %cst_27 : f32 to vector<1x512xf32>
    %91 = arith.divf %89, %90 : vector<1x512xf32>
    %92 = arith.mulf %86, %86 : vector<1x512xf32>
    %93 = arith.subf %91, %92 : vector<1x512xf32>
    %cst_28 = arith.constant 0.000000e+00 : f32
    %94 = vector.broadcast %cst_28 : f32 to vector<1x512xf32>
    %95 = arith.maximumf %93, %94 : vector<1x512xf32>
    %cst_29 = arith.constant 9.99999974E-6 : f32
    %96 = vector.broadcast %cst_29 : f32 to vector<1x512xf32>
    %97 = arith.addf %95, %96 : vector<1x512xf32>
    %98 = math.rsqrt %97 : vector<1x512xf32>
    %99 = arith.mulf %5, %98 : vector<1x512xf32>
    %100 = arith.mulf %86, %99 : vector<1x512xf32>
    %101 = arith.subf %6, %100 : vector<1x512xf32>
    %102 = vector.broadcast %99 : vector<1x512xf32> to vector<8x512xf32>
    %103 = arith.mulf %82, %102 : vector<8x512xf32>
    %104 = vector.broadcast %101 : vector<1x512xf32> to vector<8x512xf32>
    %105 = arith.addf %103, %104 : vector<8x512xf32>
    %cst_30 = arith.constant 0.000000e+00 : f32
    %106 = vector.broadcast %cst_30 : f32 to vector<8x512xf32>
    %107 = arith.maximumf %105, %106 : vector<8x512xf32>
    %108 = arith.truncf %107 : vector<8x512xf32> to vector<8x512xbf16>
    %c0_31 = arith.constant 0 : index
    %c0_32 = arith.constant 0 : index
    %109 = vector.load %arg4[%c0_31, %c0_32] : memref<512x128xbf16, #tpu.memory_space<vmem>>, vector<512x128xbf16>
    %cst_33 = arith.constant dense<0.000000e+00> : vector<8x128xf32>
    %110 = tpu.matmul %108, %109, %cst_33 {dimension_numbers = #tpu.dot_dimension_numbers<[1], [0], [0], [1], [0, 0, 1, 1], [], []>} : vector<8x512xbf16>, vector<512x128xbf16>, vector<8x128xf32> -> vector<8x128xf32>
    %111 = vector.broadcast %7 : vector<1x128xf32> to vector<8x128xf32>
    %112 = arith.addf %110, %111 : vector<8x128xf32>
    %113 = arith.truncf %112 : vector<8x128xf32> to vector<8x128xbf16>
    %c0_34 = arith.constant 0 : index
    %c0_35 = arith.constant 0 : index
    %114 = vector.load %arg6[%c0_34, %c0_35] : memref<8x128xbf16, #tpu.memory_space<vmem>>, vector<8x128xbf16>
    tpu.vector_store %arg6[%c0_34, %c0_35], %113 {strides = array<i32>} : memref<8x128xbf16, #tpu.memory_space<vmem>>, vector<8x128xbf16>,
    return
  }
}

</mosaic_0001>

<llo_original>
// kernel: tpu_custom_call.1
$region0: #{tpu_custom_call.1}
  #allocation0 [shape = 'u32[]', space=smem, size = 0x4, offset = 0x4, fixed_abs, tag = 'smem constant byte address 0x4 - core index']
  #allocation1 [shape = 'u32[72,128]{1,0:T(1,128)}', space=vmem, size = 0x9000, scoped, tag = 'internal scratch']
  %s0 = inlined_call_operand.vmem [shape: f32[8,3], index: 0, kind: input, shape index: {}]
  %s1 = inlined_call_operand.vmem [shape: f32[3,128], index: 1, kind: input, shape index: {}]
  %s2 = inlined_call_operand.hbm [shape: bf16[128,512], index: 2, kind: input, shape index: {}]
  %s3 = inlined_call_operand.hbm [shape: bf16[512,512], index: 3, kind: input, shape index: {}]
  %s4 = inlined_call_operand.hbm [shape: bf16[512,128], index: 4, kind: input, shape index: {}]
  %s5 = inlined_call_operand.hbm [shape: f32[8,512], index: 5, kind: input, shape index: {}]
  %s6 = inlined_call_operand.hbm [shape: bf16[8,128], index: 6, kind: output, shape index: {}]
  %s7 = sld [smem:[#allocation0]]
  $region50: #{tpu_custom_call.1} parent=0
    _
  %s9 = ssub.s32 1, %s7
  %s10 = scalar_select 0, %s9, %s7
  $region1: #{tpu_custom_call.1} parent=0
    #allocation2 [shape = 'u8[131072]{0}', space=vmem, size = 0x20000, scoped, tag = 'input window, operand 2, single buffered']
    #allocation3 [shape = 's32[1]{0}', space=sflag, size = 0x4, scoped, tag = 'scoped memory for tpu_custom_call.1']
    #allocation4 [shape = 's32[1]{0}', space=sflag, size = 0x4, scoped, tag = 'scoped memory for tpu_custom_call.1']
    #allocation5 [shape = 'u8[524288]{0}', space=vmem, size = 0x80000, scoped, tag = 'input window, operand 3, single buffered']
    #allocation6 [shape = 's32[1]{0}', space=sflag, size = 0x4, scoped, tag = 'scoped memory for tpu_custom_call.1']
    #allocation7 [shape = 'u8[131072]{0}', space=vmem, size = 0x20000, scoped, tag = 'input window, operand 4, single buffered']
    #allocation8 [shape = 'u8[16384]{0}', space=vmem, size = 0x4000, scoped, tag = 'input window, operand 5, single buffered']
    #allocation9 [shape = 's32[1]{0}', space=sflag, size = 0x4, scoped, tag = 'scoped memory for tpu_custom_call.1']
    #allocation10 [shape = 'u8[2048]{0}', space=vmem, size = 0x800, scoped, tag = 'output window, operand 0, single buffered']
    %11 = vsyncpa [#allocation3], 0
    %12 = vsyncpa [#allocation6], 0
    %13 = vsyncpa [#allocation9], 0
    %14 = vsyncpa [#allocation4], 0
    // Predicated region
    $region2: #{tpu_custom_call.1} parent=1 // pred_check
      _
    $region3: #{tpu_custom_call.1} parent=1 // pred_check_branch
      %16 = sbr.rel (0) target = $region5
    $region4: #{tpu_custom_call.1} parent=1 // pred_region
      _
    $region5: #{tpu_custom_call.1} parent=1 // pred_fallthru
      _
    // Predicated region
    $region6: #{tpu_custom_call.1} parent=1 // pred_check
      _
    $region7: #{tpu_custom_call.1} parent=1 // pred_check_branch
      %18 = sbr.rel (0) target = $region9
    $region8: #{tpu_custom_call.1} parent=1 // pred_region
      _
    $region9: #{tpu_custom_call.1} parent=1 // pred_fallthru
      _
    // Predicated region
    $region10: #{tpu_custom_call.1} parent=1 // pred_check
      _
    $region11: #{tpu_custom_call.1} parent=1 // pred_check_branch
      %20 = sbr.rel (0) target = $region13
    $region12: #{tpu_custom_call.1} parent=1 // pred_region
      %22 = vsyncadd [#allocation3], 0
      %s23 = sshll.u32 %s2, 4
      %s24 = int_to_ptr.hbm [resolvable:$true] %s23
      %s25 = sshll.u32 [#allocation2], 4
      %s26 = int_to_ptr.vmem [resolvable:$true] %s25
      %31 = dma.hbm_to_vmem [thread:$0]  %s24, 4096, %s26, [#allocation3], 256, 256, 16
    $region13: #{tpu_custom_call.1} parent=1 // pred_fallthru
      _
    // Predicated region
    $region14: #{tpu_custom_call.1} parent=1 // pred_check
      _
    $region15: #{tpu_custom_call.1} parent=1 // pred_check_branch
      %33 = sbr.rel (0) target = $region17
    $region16: #{tpu_custom_call.1} parent=1 // pred_region
      %35 = vsyncadd [#allocation6], 0
      %s36 = sshll.u32 %s3, 4
      %s37 = int_to_ptr.hbm [resolvable:$true] %s36
      %s38 = sshll.u32 [#allocation5], 4
      %s39 = int_to_ptr.vmem [resolvable:$true] %s38
      %44 = dma.hbm_to_vmem [thread:$0]  %s37, 16384, %s39, [#allocation6], 256, 256, 16
    $region17: #{tpu_custom_call.1} parent=1 // pred_fallthru
      _
    // Predicated region
    $region18: #{tpu_custom_call.1} parent=1 // pred_check
      _
    $region19: #{tpu_custom_call.1} parent=1 // pred_check_branch
      %46 = sbr.rel (0) target = $region21
    $region20: #{tpu_custom_call.1} parent=1 // pred_region
      %48 = vsyncadd [#allocation6], 0
      %s49 = sshll.u32 %s4, 4
      %s50 = int_to_ptr.hbm [resolvable:$true] %s49
      %s51 = sshll.u32 [#allocation7], 4
      %s52 = int_to_ptr.vmem [resolvable:$true] %s51
      %57 = dma.hbm_to_vmem [thread:$0]  %s50, 4096, %s52, [#allocation6], 64, 64, 4
    $region21: #{tpu_custom_call.1} parent=1 // pred_fallthru
      _
    // Predicated region
    $region22: #{tpu_custom_call.1} parent=1 // pred_check
      _
    $region23: #{tpu_custom_call.1} parent=1 // pred_check_branch
      %59 = sbr.rel (0) target = $region25
    $region24: #{tpu_custom_call.1} parent=1 // pred_region
      %61 = vsyncadd [#allocation9], 0
      %s63 = sshll.u32 %s5, 4
      %s64 = int_to_ptr.hbm [resolvable:$true] %s63
      %s65 = sshll.u32 [#allocation8], 4
      %s66 = int_to_ptr.vmem [resolvable:$true] %s65
      %68 = dma.hbm_to_vmem [thread:$0]  %s64, 512, %s66, [#allocation9]
    $region25: #{tpu_custom_call.1} parent=1 // pred_fallthru
      _
    // Predicated region
    $region26: #{tpu_custom_call.1} parent=1 // pred_check
      _
    $region27: #{tpu_custom_call.1} parent=1 // pred_check_branch
      %70 = sbr.rel (0) target = $region29
    $region28: #{tpu_custom_call.1} parent=1 // pred_region
      %72 = dma.done [#allocation3], 4096
    $region29: #{tpu_custom_call.1} parent=1 // pred_fallthru
      _
    // Predicated region
    $region30: #{tpu_custom_call.1} parent=1 // pred_check
      _
    $region31: #{tpu_custom_call.1} parent=1 // pred_check_branch
      %74 = sbr.rel (0) target = $region33
    $region32: #{tpu_custom_call.1} parent=1 // pred_region
      %76 = dma.done [#allocation6], 16384
    $region33: #{tpu_custom_call.1} parent=1 // pred_fallthru
      _
    // Predicated region
    $region34: #{tpu_custom_call.1} parent=1 // pred_check
      _
    $region35: #{tpu_custom_call.1} parent=1 // pred_check_branch
      %78 = sbr.rel (0) target = $region37
    $region36: #{tpu_custom_call.1} parent=1 // pred_region
      %80 = dma.done [#allocation6], 4096
    $region37: #{tpu_custom_call.1} parent=1 // pred_fallthru
      _
    // Predicated region
    $region38: #{tpu_custom_call.1} parent=1 // pred_check
      _
    $region39: #{tpu_custom_call.1} parent=1 // pred_check_branch
      %82 = sbr.rel (0) target = $region41
    $region40: #{tpu_custom_call.1} parent=1 // pred_region
      %84 = dma.done [#allocation9], 512
    $region41: #{tpu_custom_call.1} parent=1 // pred_fallthru
      _
    %v85 = vld [vmem:[#allocation8] sm:$0xff]
    %v86 = vld [vmem:[#allocation8 + $0x8] sm:$0xff]
    %v87 = vld [vmem:[#allocation8 + $0x10] sm:$0xff]
    %v88 = vld [vmem:[#allocation8 + $0x18] sm:$0xff]
    %v89 = vld [vmem:[%s0] sm:$0xff]
    %v90 = vld [vmem:[%s1] sm:$0x7]
    %92 = vset.pattern.permute.xlu0 0
    %93 = vperm.xlu0 %92, %v89
    %v94 = vpop.permute.xlu0 %93
    %v96 = vperm.slane %v90, 0
    %v97 = vmul.f32 %v94, %v96
    %98 = vset.pattern.permute.xlu0 1
    %99 = vperm.xlu0 %98, %v89
    %v100 = vpop.permute.xlu0 %99
    %v102 = vperm.slane %v90, 1
    %v103 = vmul.f32 %v100, %v102
    %v104 = vadd.f32 %v97, %v103
    %105 = vset.pattern.permute.xlu0 2
    %106 = vperm.xlu0 %105, %v89
    %v107 = vpop.permute.xlu0 %106
    %v109 = vperm.slane %v90, 2
    %v110 = vmul.f32 %v107, %v109
    %v111 = vadd.f32 %v104, %v110
    %v112 = vrot.slane %v111, 4
    %v113 = vadd.f32 %v111, %v112
    %v114 = vrot.slane %v113, 2
    %v115 = vadd.f32 %v113, %v114
    %v116 = vrot.slane %v115, 1
    %v117 = vadd.f32 %v115, %v116
    %v118 = vrcp.pop 8.0
    %v119 = vmul.f32 8.0, %v118
    %v120 = vsub.f32 1.0, %v119
    %v121 = vmul.f32 %v118, %v120
    %v122 = vadd.f32 %v118, %v121
    %vm123 = vweird.f32 %v118
    %v124 = vsel %vm123, %v118, %v122
    %v125 = vmul.f32 %v117, %v124
    %v126 = vmul.f32 %v111, %v111
    %v127 = vrot.slane %v126, 4
    %v128 = vadd.f32 %v126, %v127
    %v129 = vrot.slane %v128, 2
    %v130 = vadd.f32 %v128, %v129
    %v131 = vrot.slane %v130, 1
    %v132 = vadd.f32 %v130, %v131
    %v133 = vmul.f32 %v132, %v124
    %v134 = vmul.f32 %v125, %v125
    %v135 = vsub.f32 %v133, %v134
    %v136 = vmax.f32 %v135, 0.0
    %v137 = vadd.f32 %v136, 1e-05
    %v138 = vrsqrt.pop %v137
    %v139 = vmul.f32 %v138, %v137
    %v140 = vmul.f32 %v139, %v138
    %v141 = vmul.f32 0.5, %v140
    %v142 = vsub.f32 1.5, %v141
    %v143 = vmul.f32 %v138, %v142
    %vm144 = vweird.f32 %v137
    %vm145 = vweird.f32 %v138
    %vm146 = vmor %vm144, %vm145
    %v147 = vsel %vm146, %v138, %v143
    %v148 = vmul.f32 %v85, %v147
    %v149 = vmul.f32 %v125, %v148
    %v151 = vrot.slane %v149, 7
    %v153 = vsub.f32 %v85, %v151
    %v154 = vperm.slane %v148, 0
    %v155 = vmul.f32 %v111, %v154
    %v156 = vperm.slane %v153, 1
    %v157 = vadd.f32 %v155, %v156
    %v158 = vmax.f32 %v157, 0.0
    %v159 = vpack.c.bf16 %v158, %v158
    %v160 = vld [vmem:[#allocation2] sm:$0xff]
    %v161 = vld [vmem:[#allocation2 + $0x8] sm:$0xff]
    %v162 = vld [vmem:[#allocation2 + $0x10] sm:$0xff]
    %v163 = vld [vmem:[#allocation2 + $0x18] sm:$0xff]
    %v164 = vld [vmem:[#allocation2 + $0x20] sm:$0xff]
    %v165 = vld [vmem:[#allocation2 + $0x28] sm:$0xff]
    %v166 = vld [vmem:[#allocation2 + $0x30] sm:$0xff]
    %v167 = vld [vmem:[#allocation2 + $0x38] sm:$0xff]
    %v168 = vld [vmem:[#allocation2 + $0x40] sm:$0xff]
    %v169 = vld [vmem:[#allocation2 + $0x48] sm:$0xff]
    %v170 = vld [vmem:[#allocation2 + $0x50] sm:$0xff]
    %v171 = vld [vmem:[#allocation2 + $0x58] sm:$0xff]
    %v172 = vld [vmem:[#allocation2 + $0x60] sm:$0xff]
    %v173 = vld [vmem:[#allocation2 + $0x68] sm:$0xff]
    %v174 = vld [vmem:[#allocation2 + $0x70] sm:$0xff]
    %v175 = vld [vmem:[#allocation2 + $0x78] sm:$0xff]
    %v176 = vld [vmem:[#allocation2 + $0x80] sm:$0xff]
    %v177 = vld [vmem:[#allocation2 + $0x88] sm:$0xff]
    %v178 = vld [vmem:[#allocation2 + $0x90] sm:$0xff]
    %v179 = vld [vmem:[#allocation2 + $0x98] sm:$0xff]
    %v180 = vld [vmem:[#allocation2 + $0xa0] sm:$0xff]
    %v181 = vld [vmem:[#allocation2 + $0xa8] sm:$0xff]
    %v182 = vld [vmem:[#allocation2 + $0xb0] sm:$0xff]
    %v183 = vld [vmem:[#allocation2 + $0xb8] sm:$0xff]
    %v184 = vld [vmem:[#allocation2 + $0xc0] sm:$0xff]
    %v185 = vld [vmem:[#allocation2 + $0xc8] sm:$0xff]
    %v186 = vld [vmem:[#allocation2 + $0xd0] sm:$0xff]
    %v187 = vld [vmem:[#allocation2 + $0xd8] sm:$0xff]
    %v188 = vld [vmem:[#allocation2 + $0xe0] sm:$0xff]
    %v189 = vld [vmem:[#allocation2 + $0xe8] sm:$0xff]
    %v190 = vld [vmem:[#allocation2 + $0xf0] sm:$0xff]
    %v191 = vld [vmem:[#allocation2 + $0xf8] sm:$0xff]
    %v224 = vunpack.c.l.b16 %v160
    %v225 = vunpack.c.h.b16 %v160
    %v226 = vunpack.c.l.b16 %v161
    %v227 = vunpack.c.h.b16 %v161
    %v228 = vunpack.c.l.b16 %v162
    %v229 = vunpack.c.h.b16 %v162
    %v230 = vunpack.c.l.b16 %v163
    %v231 = vunpack.c.h.b16 %v163
    %v232 = vunpack.c.l.b16 %v164
    %v233 = vunpack.c.h.b16 %v164
    %v234 = vunpack.c.l.b16 %v165
    %v235 = vunpack.c.h.b16 %v165
    %v236 = vunpack.c.l.b16 %v166
    %v237 = vunpack.c.h.b16 %v166
    %v238 = vunpack.c.l.b16 %v167
    %v239 = vunpack.c.h.b16 %v167
    %v240 = vunpack.c.l.b16 %v168
    %v241 = vunpack.c.h.b16 %v168
    %v242 = vunpack.c.l.b16 %v169
    %v243 = vunpack.c.h.b16 %v169
    %v244 = vunpack.c.l.b16 %v170
    %v245 = vunpack.c.h.b16 %v170
    %v246 = vunpack.c.l.b16 %v171
    %v247 = vunpack.c.h.b16 %v171
    %v248 = vunpack.c.l.b16 %v172
    %v249 = vunpack.c.h.b16 %v172
    %v250 = vunpack.c.l.b16 %v173
    %v251 = vunpack.c.h.b16 %v173
    %v252 = vunpack.c.l.b16 %v174
    %v253 = vunpack.c.h.b16 %v174
    %v254 = vunpack.c.l.b16 %v175
    %v255 = vunpack.c.h.b16 %v175
    %v256 = vunpack.c.l.b16 %v176
    %v257 = vunpack.c.h.b16 %v176
    %v258 = vunpack.c.l.b16 %v177
    %v259 = vunpack.c.h.b16 %v177
    %v260 = vunpack.c.l.b16 %v178
    %v261 = vunpack.c.h.b16 %v178
    %v262 = vunpack.c.l.b16 %v179
    %v263 = vunpack.c.h.b16 %v179
    %v264 = vunpack.c.l.b16 %v180
    %v265 = vunpack.c.h.b16 %v180
    %v266 = vunpack.c.l.b16 %v181
    %v267 = vunpack.c.h.b16 %v181
    %v268 = vunpack.c.l.b16 %v182
    %v269 = vunpack.c.h.b16 %v182
    %v270 = vunpack.c.l.b16 %v183
    %v271 = vunpack.c.h.b16 %v183
    %v272 = vunpack.c.l.b16 %v184
    %v273 = vunpack.c.h.b16 %v184
    %v274 = vunpack.c.l.b16 %v185
    %v275 = vunpack.c.h.b16 %v185
    %v276 = vunpack.c.l.b16 %v186
    %v277 = vunpack.c.h.b16 %v186
    %v278 = vunpack.c.l.b16 %v187
    %v279 = vunpack.c.h.b16 %v187
    %v280 = vunpack.c.l.b16 %v188
    %v281 = vunpack.c.h.b16 %v188
    %v282 = vunpack.c.l.b16 %v189
    %v283 = vunpack.c.h.b16 %v189
    %v284 = vunpack.c.l.b16 %v190
    %v285 = vunpack.c.h.b16 %v190
    %v286 = vunpack.c.l.b16 %v191
    %v287 = vunpack.c.h.b16 %v191
    %v288 = vpack.c.b16 %v228, %v224
    %v289 = vpack.c.b16 %v229, %v225
    %v290 = vpack.c.b16 %v230, %v226
    %v291 = vpack.c.b16 %v231, %v227
    %v292 = vpack.c.b16 %v236, %v232
    %v293 = vpack.c.b16 %v237, %v233
    %v294 = vpack.c.b16 %v238, %v234
    %v295 = vpack.c.b16 %v239, %v235
    %v296 = vpack.c.b16 %v244, %v240
    %v297 = vpack.c.b16 %v245, %v241
    %v298 = vpack.c.b16 %v246, %v242
    %v299 = vpack.c.b16 %v247, %v243
    %v300 = vpack.c.b16 %v252, %v248
    %v301 = vpack.c.b16 %v253, %v249
    %v302 = vpack.c.b16 %v254, %v250
    %v303 = vpack.c.b16 %v255, %v251
    %v304 = vpack.c.b16 %v260, %v256
    %v305 = vpack.c.b16 %v261, %v257
    %v306 = vpack.c.b16 %v262, %v258
    %v307 = vpack.c.b16 %v263, %v259
    %v308 = vpack.c.b16 %v268, %v264
    %v309 = vpack.c.b16 %v269, %v265
    %v310 = vpack.c.b16 %v270, %v266
    %v311 = vpack.c.b16 %v271, %v267
    %v312 = vpack.c.b16 %v276, %v272
    %v313 = vpack.c.b16 %v277, %v273
    %v314 = vpack.c.b16 %v278, %v274
    %v315 = vpack.c.b16 %v279, %v275
    %v316 = vpack.c.b16 %v284, %v280
    %v317 = vpack.c.b16 %v285, %v281
    %v318 = vpack.c.b16 %v286, %v282
    %v319 = vpack.c.b16 %v287, %v283
    %352 = vmatpush.bf16.msra.mxu0 %v316
    %353 = vmatpush.bf16.msra.mxu0 %v312
    %354 = vmatpush.bf16.msra.mxu0 %v308
    %355 = vmatpush.bf16.msra.mxu0 %v304
    %356 = vmatpush.bf16.msra.mxu0 %v300
    %357 = vmatpush.bf16.msra.mxu0 %v296
    %358 = vmatpush.bf16.msra.mxu0 %v292
    %359 = vmatpush.bf16.msra.mxu0 %v288
    %360 = vmatmul.bf16.gmra.mxu0 %v159
    %v361 = vpop.f32.mrf.mxu0
    %v362 = vadd.f32 0.0, %v361
    %v363 = vpop.f32.mrf.mxu0
    %364 = vdwg.mxu0
    %365 = vmatpush.bf16.msra.mxu0 %v317
    %366 = vmatpush.bf16.msra.mxu0 %v313
    %367 = vmatpush.bf16.msra.mxu0 %v309
    %368 = vmatpush.bf16.msra.mxu0 %v305
    %369 = vmatpush.bf16.msra.mxu0 %v301
    %370 = vmatpush.bf16.msra.mxu0 %v297
    %371 = vmatpush.bf16.msra.mxu0 %v293
    %372 = vmatpush.bf16.msra.mxu0 %v289
    %373 = vmatmul.bf16.gmra.mxu0 %v159
    %v374 = vpop.f32.mrf.mxu0
    %v375 = vadd.f32 0.0, %v374
    %v376 = vpop.f32.mrf.mxu0
    %377 = vdwg.mxu0
    %378 = vmatpush.bf16.msra.mxu0 %v318
    %379 = vmatpush.bf16.msra.mxu0 %v314
    %380 = vmatpush.bf16.msra.mxu0 %v310
    %381 = vmatpush.bf16.msra.mxu0 %v306
    %382 = vmatpush.bf16.msra.mxu0 %v302
    %383 = vmatpush.bf16.msra.mxu0 %v298
    %384 = vmatpush.bf16.msra.mxu0 %v294
    %385 = vmatpush.bf16.msra.mxu0 %v290
    %386 = vmatmul.bf16.gmra.mxu0 %v159
    %v387 = vpop.f32.mrf.mxu0
    %v388 = vadd.f32 0.0, %v387
    %v389 = vpop.f32.mrf.mxu0
    %390 = vdwg.mxu0
    %391 = vmatpush.bf16.msra.mxu0 %v319
    %392 = vmatpush.bf16.msra.mxu0 %v315
    %393 = vmatpush.bf16.msra.mxu0 %v311
    %394 = vmatpush.bf16.msra.mxu0 %v307
    %395 = vmatpush.bf16.msra.mxu0 %v303
    %396 = vmatpush.bf16.msra.mxu0 %v299
    %397 = vmatpush.bf16.msra.mxu0 %v295
    %398 = vmatpush.bf16.msra.mxu0 %v291
    %399 = vmatmul.bf16.gmra.mxu0 %v159
    %v400 = vpop.f32.mrf.mxu0
    %v401 = vadd.f32 0.0, %v400
    %v402 = vpop.f32.mrf.mxu0
    %403 = vdwg.mxu0
    %v404 = vrot.slane %v362, 4
    %v405 = vadd.f32 %v362, %v404
    %v406 = vrot.slane %v405, 2
    %v407 = vadd.f32 %v405, %v406
    %v408 = vrot.slane %v407, 1
    %v409 = vadd.f32 %v407, %v408
    %v410 = vrot.slane %v375, 4
    %v411 = vadd.f32 %v375, %v410
    %v412 = vrot.slane %v411, 2
    %v413 = vadd.f32 %v411, %v412
    %v414 = vrot.slane %v413, 1
    %v415 = vadd.f32 %v413, %v414
    %v416 = vrot.slane %v388, 4
    %v417 = vadd.f32 %v388, %v416
    %v418 = vrot.slane %v417, 2
    %v419 = vadd.f32 %v417, %v418
    %v420 = vrot.slane %v419, 1
    %v421 = vadd.f32 %v419, %v420
    %v422 = vrot.slane %v401, 4
    %v423 = vadd.f32 %v401, %v422
    %v424 = vrot.slane %v423, 2
    %v425 = vadd.f32 %v423, %v424
    %v426 = vrot.slane %v425, 1
    %v427 = vadd.f32 %v425, %v426
    %v428 = vmul.f32 %v409, %v124
    %v429 = vmul.f32 %v415, %v124
    %v430 = vmul.f32 %v421, %v124
    %v431 = vmul.f32 %v427, %v124
    %v432 = vmul.f32 %v362, %v362
    %v433 = vmul.f32 %v375, %v375
    %v434 = vmul.f32 %v388, %v388
    %v435 = vmul.f32 %v401, %v401
    %v436 = vrot.slane %v432, 4
    %v437 = vadd.f32 %v432, %v436
    %v438 = vrot.slane %v437, 2
    %v439 = vadd.f32 %v437, %v438
    %v440 = vrot.slane %v439, 1
    %v441 = vadd.f32 %v439, %v440
    %v442 = vrot.slane %v433, 4
    %v443 = vadd.f32 %v433, %v442
    %v444 = vrot.slane %v443, 2
    %v445 = vadd.f32 %v443, %v444
    %v446 = vrot.slane %v445, 1
    %v447 = vadd.f32 %v445, %v446
    %v448 = vrot.slane %v434, 4
    %v449 = vadd.f32 %v434, %v448
    %v450 = vrot.slane %v449, 2
    %v451 = vadd.f32 %v449, %v450
    %v452 = vrot.slane %v451, 1
    %v453 = vadd.f32 %v451, %v452
    %v454 = vrot.slane %v435, 4
    %v455 = vadd.f32 %v435, %v454
    %v456 = vrot.slane %v455, 2
    %v457 = vadd.f32 %v455, %v456
    %v458 = vrot.slane %v457, 1
    %v459 = vadd.f32 %v457, %v458
    %v460 = vmul.f32 %v441, %v124
    %v461 = vmul.f32 %v447, %v124
    %v462 = vmul.f32 %v453, %v124
    %v463 = vmul.f32 %v459, %v124
    %v464 = vmul.f32 %v428, %v428
    %v465 = vmul.f32 %v429, %v429
    %v466 = vmul.f32 %v430, %v430
    %v467 = vmul.f32 %v431, %v431
    %v468 = vsub.f32 %v460, %v464
    %v469 = vsub.f32 %v461, %v465
    %v470 = vsub.f32 %v462, %v466
    %v471 = vsub.f32 %v463, %v467
    %v472 = vmax.f32 %v468, 0.0
    %v473 = vmax.f32 %v469, 0.0
    %v474 = vmax.f32 %v470, 0.0
    %v475 = vmax.f32 %v471, 0.0
    %v476 = vadd.f32 %v472, 1e-05
    %v477 = vadd.f32 %v473, 1e-05
    %v478 = vadd.f32 %v474, 1e-05
    %v479 = vadd.f32 %v475, 1e-05
    %v480 = vrsqrt.pop %v476
    %v481 = vmul.f32 %v480, %v476
    %v482 = vmul.f32 %v481, %v480
    %v483 = vmul.f32 0.5, %v482
    %v484 = vsub.f32 1.5, %v483
    %v485 = vmul.f32 %v480, %v484
    %vm486 = vweird.f32 %v476
    %vm487 = vweird.f32 %v480
    %vm488 = vmor %vm486, %vm487
    %v489 = vsel %vm488, %v480, %v485
    %v490 = vrsqrt.pop %v477
    %v491 = vmul.f32 %v490, %v477
    %v492 = vmul.f32 %v491, %v490
    %v493 = vmul.f32 0.5, %v492
    %v494 = vsub.f32 1.5, %v493
    %v495 = vmul.f32 %v490, %v494
    %vm496 = vweird.f32 %v477
    %vm497 = vweird.f32 %v490
    %vm498 = vmor %vm496, %vm497
    %v499 = vsel %vm498, %v490, %v495
    %v500 = vrsqrt.pop %v478
    %v501 = vmul.f32 %v500, %v478
    %v502 = vmul.f32 %v501, %v500
    %v503 = vmul.f32 0.5, %v502
    %v504 = vsub.f32 1.5, %v503
    %v505 = vmul.f32 %v500, %v504
    %vm506 = vweird.f32 %v478
    %vm507 = vweird.f32 %v500
    %vm508 = vmor %vm506, %vm507
    %v509 = vsel %vm508, %v500, %v505
    %v510 = vrsqrt.pop %v479
    %v511 = vmul.f32 %v510, %v479
    %v512 = vmul.f32 %v511, %v510
    %v513 = vmul.f32 0.5, %v512
    %v514 = vsub.f32 1.5, %v513
    %v515 = vmul.f32 %v510, %v514
    %vm516 = vweird.f32 %v479
    %vm517 = vweird.f32 %v510
    %vm518 = vmor %vm516, %vm517
    %v519 = vsel %vm518, %v510, %v515
    %v520 = vmul.f32 %v85, %v489
    %v521 = vmul.f32 %v86, %v499
    %v522 = vmul.f32 %v87, %v509
    %v523 = vmul.f32 %v88, %v519
    %v524 = vmul.f32 %v428, %v520
    %v525 = vmul.f32 %v429, %v521
    %v526 = vmul.f32 %v430, %v522
    %v527 = vmul.f32 %v431, %v523
    %v532 = vrot.slane %v524, 7
    %v533 = vrot.slane %v525, 7
    %v534 = vrot.slane %v526, 7
    %v535 = vrot.slane %v527, 7
    %v540 = vsub.f32 %v85, %v532
    %v541 = vsub.f32 %v86, %v533
    %v542 = vsub.f32 %v87, %v534
    %v543 = vsub.f32 %v88, %v535
    %v544 = vperm.slane %v520, 2
    %v545 = vperm.slane %v521, 2
    %v546 = vperm.slane %v522, 2
    %v547 = vperm.slane %v523, 2
    %v548 = vmul.f32 %v362, %v544
    %v549 = vmul.f32 %v375, %v545
    %v550 = vmul.f32 %v388, %v546
    %v551 = vmul.f32 %v401, %v547
    %v552 = vperm.slane %v540, 3
    %v553 = vperm.slane %v541, 3
    %v554 = vperm.slane %v542, 3
    %v555 = vperm.slane %v543, 3
    %v556 = vadd.f32 %v548, %v552
    %v557 = vadd.f32 %v549, %v553
    %v558 = vadd.f32 %v550, %v554
    %v559 = vadd.f32 %v551, %v555
    %v560 = vmax.f32 %v556, 0.0
    %v561 = vmax.f32 %v557, 0.0
    %v562 = vmax.f32 %v558, 0.0
    %v563 = vmax.f32 %v559, 0.0
    %v564 = vpack.c.bf16 %v560, %v560
    %v565 = vpack.c.bf16 %v561, %v561
    %v566 = vpack.c.bf16 %v562, %v562
    %v567 = vpack.c.bf16 %v563, %v563
    %v568 = vld [vmem:[#allocation5] sm:$0xff]
    %v569 = vld [vmem:[#allocation5 + $0x8] sm:$0xff]
    %v570 = vld [vmem:[#allocation5 + $0x10] sm:$0xff]
    %v571 = vld [vmem:[#allocation5 + $0x18] sm:$0xff]
    %v572 = vld [vmem:[#allocation5 + $0x20] sm:$0xff]
    %v573 = vld [vmem:[#allocation5 + $0x28] sm:$0xff]
    %v574 = vld [vmem:[#allocation5 + $0x30] sm:$0xff]
    %v575 = vld [vmem:[#allocation5 + $0x38] sm:$0xff]
    %v576 = vld [vmem:[#allocation5 + $0x40] sm:$0xff]
    %v577 = vld [vmem:[#allocation5 + $0x48] sm:$0xff]
    %v578 = vld [vmem:[#allocation5 + $0x50] sm:$0xff]
    %v579 = vld [vmem:[#allocation5 + $0x58] sm:$0xff]
    %v580 = vld [vmem:[#allocation5 + $0x60] sm:$0xff]
    %v581 = vld [vmem:[#allocation5 + $0x68] sm:$0xff]
    %v582 = vld [vmem:[#allocation5 + $0x70] sm:$0xff]
    %v583 = vld [vmem:[#allocation5 + $0x78] sm:$0xff]
    %v584 = vld [vmem:[#allocation5 + $0x80] sm:$0xff]
    %v585 = vld [vmem:[#allocation5 + $0x88] sm:$0xff]
    %v586 = vld [vmem:[#allocation5 + $0x90] sm:$0xff]
    %v587 = vld [vmem:[#allocation5 + $0x98] sm:$0xff]
    %v588 = vld [vmem:[#allocation5 + $0xa0] sm:$0xff]
    %v589 = vld [vmem:[#allocation5 + $0xa8] sm:$0xff]
    %v590 = vld [vmem:[#allocation5 + $0xb0] sm:$0xff]
    %v591 = vld [vmem:[#allocation5 + $0xb8] sm:$0xff]
    %v592 = vld [vmem:[#allocation5 + $0xc0] sm:$0xff]
    %v593 = vld [vmem:[#allocation5 + $0xc8] sm:$0xff]
    %v594 = vld [vmem:[#allocation5 + $0xd0] sm:$0xff]
    %v595 = vld [vmem:[#allocation5 + $0xd8] sm:$0xff]
    %v596 = vld [vmem:[#allocation5 + $0xe0] sm:$0xff]
    %v597 = vld [vmem:[#allocation5 + $0xe8] sm:$0xff]
    %v598 = vld [vmem:[#allocation5 + $0xf0] sm:$0xff]
    %v599 = vld [vmem:[#allocation5 + $0xf8] sm:$0xff]
    %v600 = vld [vmem:[#allocation5 + $0x100] sm:$0xff]
    %v601 = vld [vmem:[#allocation5 + $0x108] sm:$0xff]
    %v602 = vld [vmem:[#allocation5 + $0x110] sm:$0xff]
    %v603 = vld [vmem:[#allocation5 + $0x118] sm:$0xff]
    %v604 = vld [vmem:[#allocation5 + $0x120] sm:$0xff]
    %v605 = vld [vmem:[#allocation5 + $0x128] sm:$0xff]
    %v606 = vld [vmem:[#allocation5 + $0x130] sm:$0xff]
    %v607 = vld [vmem:[#allocation5 + $0x138] sm:$0xff]
    %v608 = vld [vmem:[#allocation5 + $0x140] sm:$0xff]
    %v609 = vld [vmem:[#allocation5 + $0x148] sm:$0xff]
    %v610 = vld [vmem:[#allocation5 + $0x150] sm:$0xff]
    %v611 = vld [vmem:[#allocation5 + $0x158] sm:$0xff]
    %v612 = vld [vmem:[#allocation5 + $0x160] sm:$0xff]
    %v613 = vld [vmem:[#allocation5 + $0x168] sm:$0xff]
    %v614 = vld [vmem:[#allocation5 + $0x170] sm:$0xff]
    %v615 = vld [vmem:[#allocation5 + $0x178] sm:$0xff]
    %v616 = vld [vmem:[#allocation5 + $0x180] sm:$0xff]
    %v617 = vld [vmem:[#allocation5 + $0x188] sm:$0xff]
    %v618 = vld [vmem:[#allocation5 + $0x190] sm:$0xff]
    %v619 = vld [vmem:[#allocation5 + $0x198] sm:$0xff]
    %v620 = vld [vmem:[#allocation5 + $0x1a0] sm:$0xff]
    %v621 = vld [vmem:[#allocation5 + $0x1a8] sm:$0xff]
    %v622 = vld [vmem:[#allocation5 + $0x1b0] sm:$0xff]
    %v623 = vld [vmem:[#allocation5 + $0x1b8] sm:$0xff]
    %v624 = vld [vmem:[#allocation5 + $0x1c0] sm:$0xff]
    %v625 = vld [vmem:[#allocation5 + $0x1c8] sm:$0xff]
    %v626 = vld [vmem:[#allocation5 + $0x1d0] sm:$0xff]
    %v627 = vld [vmem:[#allocation5 + $0x1d8] sm:$0xff]
    %v628 = vld [vmem:[#allocation5 + $0x1e0] sm:$0xff]
    %v629 = vld [vmem:[#allocation5 + $0x1e8] sm:$0xff]
    %v630 = vld [vmem:[#allocation5 + $0x1f0] sm:$0xff]
    %v631 = vld [vmem:[#allocation5 + $0x1f8] sm:$0xff]
    %v632 = vld [vmem:[#allocation5 + $0x200] sm:$0xff]
    %v633 = vld [vmem:[#allocation5 + $0x208] sm:$0xff]
    %v634 = vld [vmem:[#allocation5 + $0x210] sm:$0xff]
    %v635 = vld [vmem:[#allocation5 + $0x218] sm:$0xff]
    %v636 = vld [vmem:[#allocation5 + $0x220] sm:$0xff]
    %v637 = vld [vmem:[#allocation5 + $0x228] sm:$0xff]
    %v638 = vld [vmem:[#allocation5 + $0x230] sm:$0xff]
    %v639 = vld [vmem:[#allocation5 + $0x238] sm:$0xff]
    %v640 = vld [vmem:[#allocation5 + $0x240] sm:$0xff]
    %v641 = vld [vmem:[#allocation5 + $0x248] sm:$0xff]
    %v642 = vld [vmem:[#allocation5 + $0x250] sm:$0xff]
    %v643 = vld [vmem:[#allocation5 + $0x258] sm:$0xff]
    %v644 = vld [vmem:[#allocation5 + $0x260] sm:$0xff]
    %v645 = vld [vmem:[#allocation5 + $0x268] sm:$0xff]
    %v646 = vld [vmem:[#allocation5 + $0x270] sm:$0xff]
    %v647 = vld [vmem:[#allocation5 + $0x278] sm:$0xff]
    %v648 = vld [vmem:[#allocation5 + $0x280] sm:$0xff]
    %v649 = vld [vmem:[#allocation5 + $0x288] sm:$0xff]
    %v650 = vld [vmem:[#allocation5 + $0x290] sm:$0xff]
    %v651 = vld [vmem:[#allocation5 + $0x298] sm:$0xff]
    %v652 = vld [vmem:[#allocation5 + $0x2a0] sm:$0xff]
    %v653 = vld [vmem:[#allocation5 + $0x2a8] sm:$0xff]
    %v654 = vld [vmem:[#allocation5 + $0x2b0] sm:$0xff]
    %v655 = vld [vmem:[#allocation5 + $0x2b8] sm:$0xff]
    %v656 = vld [vmem:[#allocation5 + $0x2c0] sm:$0xff]
    %v657 = vld [vmem:[#allocation5 + $0x2c8] sm:$0xff]
    %v658 = vld [vmem:[#allocation5 + $0x2d0] sm:$0xff]
    %v659 = vld [vmem:[#allocation5 + $0x2d8] sm:$0xff]
    %v660 = vld [vmem:[#allocation5 + $0x2e0] sm:$0xff]
    %v661 = vld [vmem:[#allocation5 + $0x2e8] sm:$0xff]
    %v662 = vld [vmem:[#allocation5 + $0x2f0] sm:$0xff]
    %v663 = vld [vmem:[#allocation5 + $0x2f8] sm:$0xff]
    %v664 = vld [vmem:[#allocation5 + $0x300] sm:$0xff]
    %v665 = vld [vmem:[#allocation5 + $0x308] sm:$0xff]
    %v666 = vld [vmem:[#allocation5 + $0x310] sm:$0xff]
    %v667 = vld [vmem:[#allocation5 + $0x318] sm:$0xff]
    %v668 = vld [vmem:[#allocation5 + $0x320] sm:$0xff]
    %v669 = vld [vmem:[#allocation5 + $0x328] sm:$0xff]
    %v670 = vld [vmem:[#allocation5 + $0x330] sm:$0xff]
    %v671 = vld [vmem:[#allocation5 + $0x338] sm:$0xff]
    %v672 = vld [vmem:[#allocation5 + $0x340] sm:$0xff]
    %v673 = vld [vmem:[#allocation5 + $0x348] sm:$0xff]
    %v674 = vld [vmem:[#allocation5 + $0x350] sm:$0xff]
    %v675 = vld [vmem:[#allocation5 + $0x358] sm:$0xff]
    %v676 = vld [vmem:[#allocation5 + $0x360] sm:$0xff]
    %v677 = vld [vmem:[#allocation5 + $0x368] sm:$0xff]
    %v678 = vld [vmem:[#allocation5 + $0x370] sm:$0xff]
    %v679 = vld [vmem:[#allocation5 + $0x378] sm:$0xff]
    %v680 = vld [vmem:[#allocation5 + $0x380] sm:$0xff]
    %v681 = vld [vmem:[#allocation5 + $0x388] sm:$0xff]
    %v682 = vld [vmem:[#allocation5 + $0x390] sm:$0xff]
    %v683 = vld [vmem:[#allocation5 + $0x398] sm:$0xff]
    %v684 = vld [vmem:[#allocation5 + $0x3a0] sm:$0xff]
    %v685 = vld [vmem:[#allocation5 + $0x3a8] sm:$0xff]
    %v686 = vld [vmem:[#allocation5 + $0x3b0] sm:$0xff]
    %v687 = vld [vmem:[#allocation5 + $0x3b8] sm:$0xff]
    %v688 = vld [vmem:[#allocation5 + $0x3c0] sm:$0xff]
    %v689 = vld [vmem:[#allocation5 + $0x3c8] sm:$0xff]
    %v690 = vld [vmem:[#allocation5 + $0x3d0] sm:$0xff]
    %v691 = vld [vmem:[#allocation5 + $0x3d8] sm:$0xff]
    %v692 = vld [vmem:[#allocation5 + $0x3e0] sm:$0xff]
    %v693 = vld [vmem:[#allocation5 + $0x3e8] sm:$0xff]
    %v694 = vld [vmem:[#allocation5 + $0x3f0] sm:$0xff]
    %v695 = vld [vmem:[#allocation5 + $0x3f8] sm:$0xff]
    %v824 = vunpack.c.l.b16 %v568
    %v825 = vunpack.c.h.b16 %v568
    %v826 = vunpack.c.l.b16 %v569
    %v827 = vunpack.c.h.b16 %v569
    %v828 = vunpack.c.l.b16 %v570
    %v829 = vunpack.c.h.b16 %v570
    %v830 = vunpack.c.l.b16 %v571
    %v831 = vunpack.c.h.b16 %v571
    %v832 = vunpack.c.l.b16 %v572
    %v833 = vunpack.c.h.b16 %v572
    %v834 = vunpack.c.l.b16 %v573
    %v835 = vunpack.c.h.b16 %v573
    %v836 = vunpack.c.l.b16 %v574
    %v837 = vunpack.c.h.b16 %v574
    %v838 = vunpack.c.l.b16 %v575
    %v839 = vunpack.c.h.b16 %v575
    %v840 = vunpack.c.l.b16 %v576
    %v841 = vunpack.c.h.b16 %v576
    %v842 = vunpack.c.l.b16 %v577
    %v843 = vunpack.c.h.b16 %v577
    %v844 = vunpack.c.l.b16 %v578
    %v845 = vunpack.c.h.b16 %v578
    %v846 = vunpack.c.l.b16 %v579
    %v847 = vunpack.c.h.b16 %v579
    %v848 = vunpack.c.l.b16 %v580
    %v849 = vunpack.c.h.b16 %v580
    %v850 = vunpack.c.l.b16 %v581
    %v851 = vunpack.c.h.b16 %v581
    %v852 = vunpack.c.l.b16 %v582
    %v853 = vunpack.c.h.b16 %v582
    %v854 = vunpack.c.l.b16 %v583
    %v855 = vunpack.c.h.b16 %v583
    %v856 = vunpack.c.l.b16 %v584
    %v857 = vunpack.c.h.b16 %v584
    %v858 = vunpack.c.l.b16 %v585
    %v859 = vunpack.c.h.b16 %v585
    %v860 = vunpack.c.l.b16 %v586
    %v861 = vunpack.c.h.b16 %v586
    %v862 = vunpack.c.l.b16 %v587
    %v863 = vunpack.c.h.b16 %v587
    %v864 = vunpack.c.l.b16 %v588
    %v865 = vunpack.c.h.b16 %v588
    %v866 = vunpack.c.l.b16 %v589
    %v867 = vunpack.c.h.b16 %v589
    %v868 = vunpack.c.l.b16 %v590
    %v869 = vunpack.c.h.b16 %v590
    %v870 = vunpack.c.l.b16 %v591
    %v871 = vunpack.c.h.b16 %v591
    %v872 = vunpack.c.l.b16 %v592
    %v873 = vunpack.c.h.b16 %v592
    %v874 = vunpack.c.l.b16 %v593
    %v875 = vunpack.c.h.b16 %v593
    %v876 = vunpack.c.l.b16 %v594
    %v877 = vunpack.c.h.b16 %v594
    %v878 = vunpack.c.l.b16 %v595
    %v879 = vunpack.c.h.b16 %v595
    %v880 = vunpack.c.l.b16 %v596
    %v881 = vunpack.c.h.b16 %v596
    %v882 = vunpack.c.l.b16 %v597
    %v883 = vunpack.c.h.b16 %v597
    %v884 = vunpack.c.l.b16 %v598
    %v885 = vunpack.c.h.b16 %v598
    %v886 = vunpack.c.l.b16 %v599
    %v887 = vunpack.c.h.b16 %v599
    %v888 = vunpack.c.l.b16 %v600
    %v889 = vunpack.c.h.b16 %v600
    %v890 = vunpack.c.l.b16 %v601
    %v891 = vunpack.c.h.b16 %v601
    %v892 = vunpack.c.l.b16 %v602
    %v893 = vunpack.c.h.b16 %v602
    %v894 = vunpack.c.l.b16 %v603
    %v895 = vunpack.c.h.b16 %v603
    %v896 = vunpack.c.l.b16 %v604
    %v897 = vunpack.c.h.b16 %v604
    %v898 = vunpack.c.l.b16 %v605
    %v899 = vunpack.c.h.b16 %v605
    %v900 = vunpack.c.l.b16 %v606
    %v901 = vunpack.c.h.b16 %v606
    %v902 = vunpack.c.l.b16 %v607
    %v903 = vunpack.c.h.b16 %v607
    %v904 = vunpack.c.l.b16 %v608
    %v905 = vunpack.c.h.b16 %v608
    %v906 = vunpack.c.l.b16 %v609
    %v907 = vunpack.c.h.b16 %v609
    %v908 = vunpack.c.l.b16 %v610
    %v909 = vunpack.c.h.b16 %v610
    %v910 = vunpack.c.l.b16 %v611
    %v911 = vunpack.c.h.b16 %v611
    %v912 = vunpack.c.l.b16 %v612
    %v913 = vunpack.c.h.b16 %v612
    %v914 = vunpack.c.l.b16 %v613
    %v915 = vunpack.c.h.b16 %v613
    %v916 = vunpack.c.l.b16 %v614
    %v917 = vunpack.c.h.b16 %v614
    %v918 = vunpack.c.l.b16 %v615
    %v919 = vunpack.c.h.b16 %v615
    %v920 = vunpack.c.l.b16 %v616
    %v921 = vunpack.c.h.b16 %v616
    %v922 = vunpack.c.l.b16 %v617
    %v923 = vunpack.c.h.b16 %v617
    %v924 = vunpack.c.l.b16 %v618
    %v925 = vunpack.c.h.b16 %v618
    %v926 = vunpack.c.l.b16 %v619
    %v927 = vunpack.c.h.b16 %v619
    %v928 = vunpack.c.l.b16 %v620
    %v929 = vunpack.c.h.b16 %v620
    %v930 = vunpack.c.l.b16 %v621
    %v931 = vunpack.c.h.b16 %v621
    %v932 = vunpack.c.l.b16 %v622
    %v933 = vunpack.c.h.b16 %v622
    %v934 = vunpack.c.l.b16 %v623
    %v935 = vunpack.c.h.b16 %v623
    %v936 = vunpack.c.l.b16 %v624
    %v937 = vunpack.c.h.b16 %v624
    %v938 = vunpack.c.l.b16 %v625
    %v939 = vunpack.c.h.b16 %v625
    %v940 = vunpack.c.l.b16 %v626
    %v941 = vunpack.c.h.b16 %v626
    %v942 = vunpack.c.l.b16 %v627
    %v943 = vunpack.c.h.b16 %v627
    %v944 = vunpack.c.l.b16 %v628
    %v945 = vunpack.c.h.b16 %v628
    %v946 = vunpack.c.l.b16 %v629
    %v947 = vunpack.c.h.b16 %v629
    %v948 = vunpack.c.l.b16 %v630
    %v949 = vunpack.c.h.b16 %v630
    %v950 = vunpack.c.l.b16 %v631
    %v951 = vunpack.c.h.b16 %v631
    %v952 = vunpack.c.l.b16 %v632
    %v953 = vunpack.c.h.b16 %v632
    %v954 = vunpack.c.l.b16 %v633
    %v955 = vunpack.c.h.b16 %v633
    %v956 = vunpack.c.l.b16 %v634
    %v957 = vunpack.c.h.b16 %v634
    %v958 = vunpack.c.l.b16 %v635
    %v959 = vunpack.c.h.b16 %v635
    %v960 = vunpack.c.l.b16 %v636
    %v961 = vunpack.c.h.b16 %v636
    %v962 = vunpack.c.l.b16 %v637
    %v963 = vunpack.c.h.b16 %v637
    %v964 = vunpack.c.l.b16 %v638
    %v965 = vunpack.c.h.b16 %v638
    %v966 = vunpack.c.l.b16 %v639
    %v967 = vunpack.c.h.b16 %v639
    %v968 = vunpack.c.l.b16 %v640
    %v969 = vunpack.c.h.b16 %v640
    %v970 = vunpack.c.l.b16 %v641
    %v971 = vunpack.c.h.b16 %v641
    %v972 = vunpack.c.l.b16 %v642
    %v973 = vunpack.c.h.b16 %v642
    %v974 = vunpack.c.l.b16 %v643
    %v975 = vunpack.c.h.b16 %v643
    %v976 = vunpack.c.l.b16 %v644
    %v977 = vunpack.c.h.b16 %v644
    %v978 = vunpack.c.l.b16 %v645
    %v979 = vunpack.c.h.b16 %v645
    %v980 = vunpack.c.l.b16 %v646
    %v981 = vunpack.c.h.b16 %v646
    %v982 = vunpack.c.l.b16 %v647
    %v983 = vunpack.c.h.b16 %v647
    %v984 = vunpack.c.l.b16 %v648
    %v985 = vunpack.c.h.b16 %v648
    %v986 = vunpack.c.l.b16 %v649
    %v987 = vunpack.c.h.b16 %v649
    %v988 = vunpack.c.l.b16 %v650
    %v989 = vunpack.c.h.b16 %v650
    %v990 = vunpack.c.l.b16 %v651
    %v991 = vunpack.c.h.b16 %v651
    %v992 = vunpack.c.l.b16 %v652
    %v993 = vunpack.c.h.b16 %v652
    %v994 = vunpack.c.l.b16 %v653
    %v995 = vunpack.c.h.b16 %v653
    %v996 = vunpack.c.l.b16 %v654
    %v997 = vunpack.c.h.b16 %v654
    %v998 = vunpack.c.l.b16 %v655
    %v999 = vunpack.c.h.b16 %v655
    %v1000 = vunpack.c.l.b16 %v656
    %v1001 = vunpack.c.h.b16 %v656
    %v1002 = vunpack.c.l.b16 %v657
    %v1003 = vunpack.c.h.b16 %v657
    %v1004 = vunpack.c.l.b16 %v658
    %v1005 = vunpack.c.h.b16 %v658
    %v1006 = vunpack.c.l.b16 %v659
    %v1007 = vunpack.c.h.b16 %v659
    %v1008 = vunpack.c.l.b16 %v660
    %v1009 = vunpack.c.h.b16 %v660
    %v1010 = vunpack.c.l.b16 %v661
    %v1011 = vunpack.c.h.b16 %v661
    %v1012 = vunpack.c.l.b16 %v662
    %v1013 = vunpack.c.h.b16 %v662
    %v1014 = vunpack.c.l.b16 %v663
    %v1015 = vunpack.c.h.b16 %v663
    %v1016 = vunpack.c.l.b16 %v664
    %v1017 = vunpack.c.h.b16 %v664
    %v1018 = vunpack.c.l.b16 %v665
    %v1019 = vunpack.c.h.b16 %v665
    %v1020 = vunpack.c.l.b16 %v666
    %v1021 = vunpack.c.h.b16 %v666
    %v1022 = vunpack.c.l.b16 %v667
    %v1023 = vunpack.c.h.b16 %v667
    %v1024 = vunpack.c.l.b16 %v668
    %v1025 = vunpack.c.h.b16 %v668
    %v1026 = vunpack.c.l.b16 %v669
    %v1027 = vunpack.c.h.b16 %v669
    %v1028 = vunpack.c.l.b16 %v670
    %v1029 = vunpack.c.h.b16 %v670
    %v1030 = vunpack.c.l.b16 %v671
    %v1031 = vunpack.c.h.b16 %v671
    %v1032 = vunpack.c.l.b16 %v672
    %v1033 = vunpack.c.h.b16 %v672
    %v1034 = vunpack.c.l.b16 %v673
    %v1035 = vunpack.c.h.b16 %v673
    %v1036 = vunpack.c.l.b16 %v674
    %v1037 = vunpack.c.h.b16 %v674
    %v1038 = vunpack.c.l.b16 %v675
    %v1039 = vunpack.c.h.b16 %v675
    %v1040 = vunpack.c.l.b16 %v676
    %v1041 = vunpack.c.h.b16 %v676
    %v1042 = vunpack.c.l.b16 %v677
    %v1043 = vunpack.c.h.b16 %v677
    %v1044 = vunpack.c.l.b16 %v678
    %v1045 = vunpack.c.h.b16 %v678
    %v1046 = vunpack.c.l.b16 %v679
    %v1047 = vunpack.c.h.b16 %v679
    %v1048 = vunpack.c.l.b16 %v680
    %v1049 = vunpack.c.h.b16 %v680
    %v1050 = vunpack.c.l.b16 %v681
    %v1051 = vunpack.c.h.b16 %v681
    %v1052 = vunpack.c.l.b16 %v682
    %v1053 = vunpack.c.h.b16 %v682
    %v1054 = vunpack.c.l.b16 %v683
    %v1055 = vunpack.c.h.b16 %v683
    %v1056 = vunpack.c.l.b16 %v684
    %v1057 = vunpack.c.h.b16 %v684
    %v1058 = vunpack.c.l.b16 %v685
    %v1059 = vunpack.c.h.b16 %v685
    %v1060 = vunpack.c.l.b16 %v686
    %v1061 = vunpack.c.h.b16 %v686
    %v1062 = vunpack.c.l.b16 %v687
    %v1063 = vunpack.c.h.b16 %v687
    %v1064 = vunpack.c.l.b16 %v688
    %v1065 = vunpack.c.h.b16 %v688
    %v1066 = vunpack.c.l.b16 %v689
    %v1067 = vunpack.c.h.b16 %v689
    %v1068 = vunpack.c.l.b16 %v690
    %v1069 = vunpack.c.h.b16 %v690
    %v1070 = vunpack.c.l.b16 %v691
    %v1071 = vunpack.c.h.b16 %v691
    %v1072 = vunpack.c.l.b16 %v692
    %v1073 = vunpack.c.h.b16 %v692
    %v1074 = vunpack.c.l.b16 %v693
    %v1075 = vunpack.c.h.b16 %v693
    %v1076 = vunpack.c.l.b16 %v694
    %v1077 = vunpack.c.h.b16 %v694
    %v1078 = vunpack.c.l.b16 %v695
    %v1079 = vunpack.c.h.b16 %v695
    %v1080 = vpack.c.b16 %v828, %v824
    %v1081 = vpack.c.b16 %v829, %v825
    %v1082 = vpack.c.b16 %v830, %v826
    %v1083 = vpack.c.b16 %v831, %v827
    %v1084 = vpack.c.b16 %v836, %v832
    %v1085 = vpack.c.b16 %v837, %v833
    %v1086 = vpack.c.b16 %v838, %v834
    %v1087 = vpack.c.b16 %v839, %v835
    %v1088 = vpack.c.b16 %v844, %v840
    %v1089 = vpack.c.b16 %v845, %v841
    %v1090 = vpack.c.b16 %v846, %v842
    %v1091 = vpack.c.b16 %v847, %v843
    %v1092 = vpack.c.b16 %v852, %v848
    %v1093 = vpack.c.b16 %v853, %v849
    %v1094 = vpack.c.b16 %v854, %v850
    %v1095 = vpack.c.b16 %v855, %v851
    %v1096 = vpack.c.b16 %v860, %v856
    %v1097 = vpack.c.b16 %v861, %v857
    %v1098 = vpack.c.b16 %v862, %v858
    %v1099 = vpack.c.b16 %v863, %v859
    %v1100 = vpack.c.b16 %v868, %v864
    %v1101 = vpack.c.b16 %v869, %v865
    %v1102 = vpack.c.b16 %v870, %v866
    %v1103 = vpack.c.b16 %v871, %v867
    %v1104 = vpack.c.b16 %v876, %v872
    %v1105 = vpack.c.b16 %v877, %v873
    %v1106 = vpack.c.b16 %v878, %v874
    %v1107 = vpack.c.b16 %v879, %v875
    %v1108 = vpack.c.b16 %v884, %v880
    %v1109 = vpack.c.b16 %v885, %v881
    %v1110 = vpack.c.b16 %v886, %v882
    %v1111 = vpack.c.b16 %v887, %v883
    %v1112 = vpack.c.b16 %v892, %v888
    %v1113 = vpack.c.b16 %v893, %v889
    %v1114 = vpack.c.b16 %v894, %v890
    %v1115 = vpack.c.b16 %v895, %v891
    %v1116 = vpack.c.b16 %v900, %v896
    %v1117 = vpack.c.b16 %v901, %v897
    %v1118 = vpack.c.b16 %v902, %v898
    %v1119 = vpack.c.b16 %v903, %v899
    %v1120 = vpack.c.b16 %v908, %v904
    %v1121 = vpack.c.b16 %v909, %v905
    %v1122 = vpack.c.b16 %v910, %v906
    %v1123 = vpack.c.b16 %v911, %v907
    %v1124 = vpack.c.b16 %v916, %v912
    %v1125 = vpack.c.b16 %v917, %v913
    %v1126 = vpack.c.b16 %v918, %v914
    %v1127 = vpack.c.b16 %v919, %v915
    %v1128 = vpack.c.b16 %v924, %v920
    %v1129 = vpack.c.b16 %v925, %v921
    %v1130 = vpack.c.b16 %v926, %v922
    %v1131 = vpack.c.b16 %v927, %v923
    %v1132 = vpack.c.b16 %v932, %v928
    %v1133 = vpack.c.b16 %v933, %v929
    %v1134 = vpack.c.b16 %v934, %v930
    %v1135 = vpack.c.b16 %v935, %v931
    %v1136 = vpack.c.b16 %v940, %v936
    %v1137 = vpack.c.b16 %v941, %v937
    %v1138 = vpack.c.b16 %v942, %v938
    %v1139 = vpack.c.b16 %v943, %v939
    %v1140 = vpack.c.b16 %v948, %v944
    %v1141 = vpack.c.b16 %v949, %v945
    %v1142 = vpack.c.b16 %v950, %v946
    %v1143 = vpack.c.b16 %v951, %v947
    %v1144 = vpack.c.b16 %v956, %v952
    %v1145 = vpack.c.b16 %v957, %v953
    %v1146 = vpack.c.b16 %v958, %v954
    %v1147 = vpack.c.b16 %v959, %v955
    %v1148 = vpack.c.b16 %v964, %v960
    %v1149 = vpack.c.b16 %v965, %v961
    %v1150 = vpack.c.b16 %v966, %v962
    %v1151 = vpack.c.b16 %v967, %v963
    %v1152 = vpack.c.b16 %v972, %v968
    %v1153 = vpack.c.b16 %v973, %v969
    %v1154 = vpack.c.b16 %v974, %v970
    %v1155 = vpack.c.b16 %v975, %v971
    %v1156 = vpack.c.b16 %v980, %v976
    %v1157 = vpack.c.b16 %v981, %v977
    %v1158 = vpack.c.b16 %v982, %v978
    %v1159 = vpack.c.b16 %v983, %v979
    %v1160 = vpack.c.b16 %v988, %v984
    %v1161 = vpack.c.b16 %v989, %v985
    %v1162 = vpack.c.b16 %v990, %v986
    %v1163 = vpack.c.b16 %v991, %v987
    %v1164 = vpack.c.b16 %v996, %v992
    %v1165 = vpack.c.b16 %v997, %v993
    %v1166 = vpack.c.b16 %v998, %v994
    %v1167 = vpack.c.b16 %v999, %v995
    %v1168 = vpack.c.b16 %v1004, %v1000
    %v1169 = vpack.c.b16 %v1005, %v1001
    %v1170 = vpack.c.b16 %v1006, %v1002
    %v1171 = vpack.c.b16 %v1007, %v1003
    %v1172 = vpack.c.b16 %v1012, %v1008
    %v1173 = vpack.c.b16 %v1013, %v1009
    %v1174 = vpack.c.b16 %v1014, %v1010
    %v1175 = vpack.c.b16 %v1015, %v1011
    %v1176 = vpack.c.b16 %v1020, %v1016
    %v1177 = vpack.c.b16 %v1021, %v1017
    %v1178 = vpack.c.b16 %v1022, %v1018
    %v1179 = vpack.c.b16 %v1023, %v1019
    %v1180 = vpack.c.b16 %v1028, %v1024
    %v1181 = vpack.c.b16 %v1029, %v1025
    %v1182 = vpack.c.b16 %v1030, %v1026
    %v1183 = vpack.c.b16 %v1031, %v1027
    %v1184 = vpack.c.b16 %v1036, %v1032
    %v1185 = vpack.c.b16 %v1037, %v1033
    %v1186 = vpack.c.b16 %v1038, %v1034
    %v1187 = vpack.c.b16 %v1039, %v1035
    %v1188 = vpack.c.b16 %v1044, %v1040
    %v1189 = vpack.c.b16 %v1045, %v1041
    %v1190 = vpack.c.b16 %v1046, %v1042
    %v1191 = vpack.c.b16 %v1047, %v1043
    %v1192 = vpack.c.b16 %v1052, %v1048
    %v1193 = vpack.c.b16 %v1053, %v1049
    %v1194 = vpack.c.b16 %v1054, %v1050
    %v1195 = vpack.c.b16 %v1055, %v1051
    %v1196 = vpack.c.b16 %v1060, %v1056
    %v1197 = vpack.c.b16 %v1061, %v1057
    %v1198 = vpack.c.b16 %v1062, %v1058
    %v1199 = vpack.c.b16 %v1063, %v1059
    %v1200 = vpack.c.b16 %v1068, %v1064
    %v1201 = vpack.c.b16 %v1069, %v1065
    %v1202 = vpack.c.b16 %v1070, %v1066
    %v1203 = vpack.c.b16 %v1071, %v1067
    %v1204 = vpack.c.b16 %v1076, %v1072
    %v1205 = vpack.c.b16 %v1077, %v1073
    %v1206 = vpack.c.b16 %v1078, %v1074
    %v1207 = vpack.c.b16 %v1079, %v1075
    %1336 = vmatpush.bf16.msra.mxu0 %v1108
    %1337 = vmatpush.bf16.msra.mxu0 %v1104
    %1338 = vmatpush.bf16.msra.mxu0 %v1100
    %1339 = vmatpush.bf16.msra.mxu0 %v1096
    %1340 = vmatpush.bf16.msra.mxu0 %v1092
    %1341 = vmatpush.bf16.msra.mxu0 %v1088
    %1342 = vmatpush.bf16.msra.mxu0 %v1084
    %1343 = vmatpush.bf16.msra.mxu0 %v1080
    %1344 = vmatmul.bf16.gmra.mxu0 %v564
    %v1345 = vpop.f32.mrf.mxu0
    %v1346 = vadd.f32 0.0, %v1345
    %v1347 = vpop.f32.mrf.mxu0
    %1348 = vdwg.mxu0
    %1349 = vmatpush.bf16.msra.mxu0 %v1140
    %1350 = vmatpush.bf16.msra.mxu0 %v1136
    %1351 = vmatpush.bf16.msra.mxu0 %v1132
    %1352 = vmatpush.bf16.msra.mxu0 %v1128
    %1353 = vmatpush.bf16.msra.mxu0 %v1124
    %1354 = vmatpush.bf16.msra.mxu0 %v1120
    %1355 = vmatpush.bf16.msra.mxu0 %v1116
    %1356 = vmatpush.bf16.msra.mxu0 %v1112
    %1357 = vmatmul.bf16.gmra.mxu0 %v565
    %v1358 = vpop.f32.mrf.mxu0
    %v1359 = vadd.f32 %v1346, %v1358
    %v1360 = vpop.f32.mrf.mxu0
    %1361 = vdwg.mxu0
    %1362 = vmatpush.bf16.msra.mxu0 %v1172
    %1363 = vmatpush.bf16.msra.mxu0 %v1168
    %1364 = vmatpush.bf16.msra.mxu0 %v1164
    %1365 = vmatpush.bf16.msra.mxu0 %v1160
    %1366 = vmatpush.bf16.msra.mxu0 %v1156
    %1367 = vmatpush.bf16.msra.mxu0 %v1152
    %1368 = vmatpush.bf16.msra.mxu0 %v1148
    %1369 = vmatpush.bf16.msra.mxu0 %v1144
    %1370 = vmatmul.bf16.gmra.mxu0 %v566
    %v1371 = vpop.f32.mrf.mxu0
    %v1372 = vadd.f32 %v1359, %v1371
    %v1373 = vpop.f32.mrf.mxu0
    %1374 = vdwg.mxu0
    %1375 = vmatpush.bf16.msra.mxu0 %v1204
    %1376 = vmatpush.bf16.msra.mxu0 %v1200
    %1377 = vmatpush.bf16.msra.mxu0 %v1196
    %1378 = vmatpush.bf16.msra.mxu0 %v1192
    %1379 = vmatpush.bf16.msra.mxu0 %v1188
    %1380 = vmatpush.bf16.msra.mxu0 %v1184
    %1381 = vmatpush.bf16.msra.mxu0 %v1180
    %1382 = vmatpush.bf16.msra.mxu0 %v1176
    %1383 = vmatmul.bf16.gmra.mxu0 %v567
    %v1384 = vpop.f32.mrf.mxu0
    %v1385 = vadd.f32 %v1372, %v1384
    %v1386 = vpop.f32.mrf.mxu0
    %1387 = vdwg.mxu0
    %1388 = vmatpush.bf16.msra.mxu0 %v1109
    %1389 = vmatpush.bf16.msra.mxu0 %v1105
    %1390 = vmatpush.bf16.msra.mxu0 %v1101
    %1391 = vmatpush.bf16.msra.mxu0 %v1097
    %1392 = vmatpush.bf16.msra.mxu0 %v1093
    %1393 = vmatpush.bf16.msra.mxu0 %v1089
    %1394 = vmatpush.bf16.msra.mxu0 %v1085
    %1395 = vmatpush.bf16.msra.mxu0 %v1081
    %1396 = vmatmul.bf16.gmra.mxu0 %v564
    %v1397 = vpop.f32.mrf.mxu0
    %v1398 = vadd.f32 0.0, %v1397
    %v1399 = vpop.f32.mrf.mxu0
    %1400 = vdwg.mxu0
    %1401 = vmatpush.bf16.msra.mxu0 %v1141
    %1402 = vmatpush.bf16.msra.mxu0 %v1137
    %1403 = vmatpush.bf16.msra.mxu0 %v1133
    %1404 = vmatpush.bf16.msra.mxu0 %v1129
    %1405 = vmatpush.bf16.msra.mxu0 %v1125
    %1406 = vmatpush.bf16.msra.mxu0 %v1121
    %1407 = vmatpush.bf16.msra.mxu0 %v1117
    %1408 = vmatpush.bf16.msra.mxu0 %v1113
    %1409 = vmatmul.bf16.gmra.mxu0 %v565
    %v1410 = vpop.f32.mrf.mxu0
    %v1411 = vadd.f32 %v1398, %v1410
    %v1412 = vpop.f32.mrf.mxu0
    %1413 = vdwg.mxu0
    %1414 = vmatpush.bf16.msra.mxu0 %v1173
    %1415 = vmatpush.bf16.msra.mxu0 %v1169
    %1416 = vmatpush.bf16.msra.mxu0 %v1165
    %1417 = vmatpush.bf16.msra.mxu0 %v1161
    %1418 = vmatpush.bf16.msra.mxu0 %v1157
    %1419 = vmatpush.bf16.msra.mxu0 %v1153
    %1420 = vmatpush.bf16.msra.mxu0 %v1149
    %1421 = vmatpush.bf16.msra.mxu0 %v1145
    %1422 = vmatmul.bf16.gmra.mxu0 %v566
    %v1423 = vpop.f32.mrf.mxu0
    %v1424 = vadd.f32 %v1411, %v1423
    %v1425 = vpop.f32.mrf.mxu0
    %1426 = vdwg.mxu0
    %1427 = vmatpush.bf16.msra.mxu0 %v1205
    %1428 = vmatpush.bf16.msra.mxu0 %v1201
    %1429 = vmatpush.bf16.msra.mxu0 %v1197
    %1430 = vmatpush.bf16.msra.mxu0 %v1193
    %1431 = vmatpush.bf16.msra.mxu0 %v1189
    %1432 = vmatpush.bf16.msra.mxu0 %v1185
    %1433 = vmatpush.bf16.msra.mxu0 %v1181
    %1434 = vmatpush.bf16.msra.mxu0 %v1177
    %1435 = vmatmul.bf16.gmra.mxu0 %v567
    %v1436 = vpop.f32.mrf.mxu0
    %v1437 = vadd.f32 %v1424, %v1436
    %v1438 = vpop.f32.mrf.mxu0
    %1439 = vdwg.mxu0
    %1440 = vmatpush.bf16.msra.mxu0 %v1110
    %1441 = vmatpush.bf16.msra.mxu0 %v1106
    %1442 = vmatpush.bf16.msra.mxu0 %v1102
    %1443 = vmatpush.bf16.msra.mxu0 %v1098
    %1444 = vmatpush.bf16.msra.mxu0 %v1094
    %1445 = vmatpush.bf16.msra.mxu0 %v1090
    %1446 = vmatpush.bf16.msra.mxu0 %v1086
    %1447 = vmatpush.bf16.msra.mxu0 %v1082
    %1448 = vmatmul.bf16.gmra.mxu0 %v564
    %v1449 = vpop.f32.mrf.mxu0
    %v1450 = vadd.f32 0.0, %v1449
    %v1451 = vpop.f32.mrf.mxu0
    %1452 = vdwg.mxu0
    %1453 = vmatpush.bf16.msra.mxu0 %v1142
    %1454 = vmatpush.bf16.msra.mxu0 %v1138
    %1455 = vmatpush.bf16.msra.mxu0 %v1134
    %1456 = vmatpush.bf16.msra.mxu0 %v1130
    %1457 = vmatpush.bf16.msra.mxu0 %v1126
    %1458 = vmatpush.bf16.msra.mxu0 %v1122
    %1459 = vmatpush.bf16.msra.mxu0 %v1118
    %1460 = vmatpush.bf16.msra.mxu0 %v1114
    %1461 = vmatmul.bf16.gmra.mxu0 %v565
    %v1462 = vpop.f32.mrf.mxu0
    %v1463 = vadd.f32 %v1450, %v1462
    %v1464 = vpop.f32.mrf.mxu0
    %1465 = vdwg.mxu0
    %1466 = vmatpush.bf16.msra.mxu0 %v1174
    %1467 = vmatpush.bf16.msra.mxu0 %v1170
    %1468 = vmatpush.bf16.msra.mxu0 %v1166
    %1469 = vmatpush.bf16.msra.mxu0 %v1162
    %1470 = vmatpush.bf16.msra.mxu0 %v1158
    %1471 = vmatpush.bf16.msra.mxu0 %v1154
    %1472 = vmatpush.bf16.msra.mxu0 %v1150
    %1473 = vmatpush.bf16.msra.mxu0 %v1146
    %1474 = vmatmul.bf16.gmra.mxu0 %v566
    %v1475 = vpop.f32.mrf.mxu0
    %v1476 = vadd.f32 %v1463, %v1475
    %v1477 = vpop.f32.mrf.mxu0
    %1478 = vdwg.mxu0
    %1479 = vmatpush.bf16.msra.mxu0 %v1206
    %1480 = vmatpush.bf16.msra.mxu0 %v1202
    %1481 = vmatpush.bf16.msra.mxu0 %v1198
    %1482 = vmatpush.bf16.msra.mxu0 %v1194
    %1483 = vmatpush.bf16.msra.mxu0 %v1190
    %1484 = vmatpush.bf16.msra.mxu0 %v1186
    %1485 = vmatpush.bf16.msra.mxu0 %v1182
    %1486 = vmatpush.bf16.msra.mxu0 %v1178
    %1487 = vmatmul.bf16.gmra.mxu0 %v567
    %v1488 = vpop.f32.mrf.mxu0
    %v1489 = vadd.f32 %v1476, %v1488
    %v1490 = vpop.f32.mrf.mxu0
    %1491 = vdwg.mxu0
    %1492 = vmatpush.bf16.msra.mxu0 %v1111
    %1493 = vmatpush.bf16.msra.mxu0 %v1107
    %1494 = vmatpush.bf16.msra.mxu0 %v1103
    %1495 = vmatpush.bf16.msra.mxu0 %v1099
    %1496 = vmatpush.bf16.msra.mxu0 %v1095
    %1497 = vmatpush.bf16.msra.mxu0 %v1091
    %1498 = vmatpush.bf16.msra.mxu0 %v1087
    %1499 = vmatpush.bf16.msra.mxu0 %v1083
    %1500 = vmatmul.bf16.gmra.mxu0 %v564
    %v1501 = vpop.f32.mrf.mxu0
    %v1502 = vadd.f32 0.0, %v1501
    %v1503 = vpop.f32.mrf.mxu0
    %1504 = vdwg.mxu0
    %1505 = vmatpush.bf16.msra.mxu0 %v1143
    %1506 = vmatpush.bf16.msra.mxu0 %v1139
    %1507 = vmatpush.bf16.msra.mxu0 %v1135
    %1508 = vmatpush.bf16.msra.mxu0 %v1131
    %1509 = vmatpush.bf16.msra.mxu0 %v1127
    %1510 = vmatpush.bf16.msra.mxu0 %v1123
    %1511 = vmatpush.bf16.msra.mxu0 %v1119
    %1512 = vmatpush.bf16.msra.mxu0 %v1115
    %1513 = vmatmul.bf16.gmra.mxu0 %v565
    %v1514 = vpop.f32.mrf.mxu0
    %v1515 = vadd.f32 %v1502, %v1514
    %v1516 = vpop.f32.mrf.mxu0
    %1517 = vdwg.mxu0
    %1518 = vmatpush.bf16.msra.mxu0 %v1175
    %1519 = vmatpush.bf16.msra.mxu0 %v1171
    %1520 = vmatpush.bf16.msra.mxu0 %v1167
    %1521 = vmatpush.bf16.msra.mxu0 %v1163
    %1522 = vmatpush.bf16.msra.mxu0 %v1159
    %1523 = vmatpush.bf16.msra.mxu0 %v1155
    %1524 = vmatpush.bf16.msra.mxu0 %v1151
    %1525 = vmatpush.bf16.msra.mxu0 %v1147
    %1526 = vmatmul.bf16.gmra.mxu0 %v566
    %v1527 = vpop.f32.mrf.mxu0
    %v1528 = vadd.f32 %v1515, %v1527
    %v1529 = vpop.f32.mrf.mxu0
    %1530 = vdwg.mxu0
    %1531 = vmatpush.bf16.msra.mxu0 %v1207
    %1532 = vmatpush.bf16.msra.mxu0 %v1203
    %1533 = vmatpush.bf16.msra.mxu0 %v1199
    %1534 = vmatpush.bf16.msra.mxu0 %v1195
    %1535 = vmatpush.bf16.msra.mxu0 %v1191
    %1536 = vmatpush.bf16.msra.mxu0 %v1187
    %1537 = vmatpush.bf16.msra.mxu0 %v1183
    %1538 = vmatpush.bf16.msra.mxu0 %v1179
    %1539 = vmatmul.bf16.gmra.mxu0 %v567
    %v1540 = vpop.f32.mrf.mxu0
    %v1541 = vadd.f32 %v1528, %v1540
    %v1542 = vpop.f32.mrf.mxu0
    %1543 = vdwg.mxu0
    %v1544 = vrot.slane %v1385, 4
    %v1545 = vadd.f32 %v1385, %v1544
    %v1546 = vrot.slane %v1545, 2
    %v1547 = vadd.f32 %v1545, %v1546
    %v1548 = vrot.slane %v1547, 1
    %v1549 = vadd.f32 %v1547, %v1548
    %v1550 = vrot.slane %v1437, 4
    %v1551 = vadd.f32 %v1437, %v1550
    %v1552 = vrot.slane %v1551, 2
    %v1553 = vadd.f32 %v1551, %v1552
    %v1554 = vrot.slane %v1553, 1
    %v1555 = vadd.f32 %v1553, %v1554
    %v1556 = vrot.slane %v1489, 4
    %v1557 = vadd.f32 %v1489, %v1556
    %v1558 = vrot.slane %v1557, 2
    %v1559 = vadd.f32 %v1557, %v1558
    %v1560 = vrot.slane %v1559, 1
    %v1561 = vadd.f32 %v1559, %v1560
    %v1562 = vrot.slane %v1541, 4
    %v1563 = vadd.f32 %v1541, %v1562
    %v1564 = vrot.slane %v1563, 2
    %v1565 = vadd.f32 %v1563, %v1564
    %v1566 = vrot.slane %v1565, 1
    %v1567 = vadd.f32 %v1565, %v1566
    %v1568 = vmul.f32 %v1549, %v124
    %v1569 = vmul.f32 %v1555, %v124
    %v1570 = vmul.f32 %v1561, %v124
    %v1571 = vmul.f32 %v1567, %v124
    %v1572 = vmul.f32 %v1385, %v1385
    %v1573 = vmul.f32 %v1437, %v1437
    %v1574 = vmul.f32 %v1489, %v1489
    %v1575 = vmul.f32 %v1541, %v1541
    %v1576 = vrot.slane %v1572, 4
    %v1577 = vadd.f32 %v1572, %v1576
    %v1578 = vrot.slane %v1577, 2
    %v1579 = vadd.f32 %v1577, %v1578
    %v1580 = vrot.slane %v1579, 1
    %v1581 = vadd.f32 %v1579, %v1580
    %v1582 = vrot.slane %v1573, 4
    %v1583 = vadd.f32 %v1573, %v1582
    %v1584 = vrot.slane %v1583, 2
    %v1585 = vadd.f32 %v1583, %v1584
    %v1586 = vrot.slane %v1585, 1
    %v1587 = vadd.f32 %v1585, %v1586
    %v1588 = vrot.slane %v1574, 4
    %v1589 = vadd.f32 %v1574, %v1588
    %v1590 = vrot.slane %v1589, 2
    %v1591 = vadd.f32 %v1589, %v1590
    %v1592 = vrot.slane %v1591, 1
    %v1593 = vadd.f32 %v1591, %v1592
    %v1594 = vrot.slane %v1575, 4
    %v1595 = vadd.f32 %v1575, %v1594
    %v1596 = vrot.slane %v1595, 2
    %v1597 = vadd.f32 %v1595, %v1596
    %v1598 = vrot.slane %v1597, 1
    %v1599 = vadd.f32 %v1597, %v1598
    %v1600 = vmul.f32 %v1581, %v124
    %v1601 = vmul.f32 %v1587, %v124
    %v1602 = vmul.f32 %v1593, %v124
    %v1603 = vmul.f32 %v1599, %v124
    %v1604 = vmul.f32 %v1568, %v1568
    %v1605 = vmul.f32 %v1569, %v1569
    %v1606 = vmul.f32 %v1570, %v1570
    %v1607 = vmul.f32 %v1571, %v1571
    %v1608 = vsub.f32 %v1600, %v1604
    %v1609 = vsub.f32 %v1601, %v1605
    %v1610 = vsub.f32 %v1602, %v1606
    %v1611 = vsub.f32 %v1603, %v1607
    %v1612 = vmax.f32 %v1608, 0.0
    %v1613 = vmax.f32 %v1609, 0.0
    %v1614 = vmax.f32 %v1610, 0.0
    %v1615 = vmax.f32 %v1611, 0.0
    %v1616 = vadd.f32 %v1612, 1e-05
    %v1617 = vadd.f32 %v1613, 1e-05
    %v1618 = vadd.f32 %v1614, 1e-05
    %v1619 = vadd.f32 %v1615, 1e-05
    %v1620 = vrsqrt.pop %v1616
    %v1621 = vmul.f32 %v1620, %v1616
    %v1622 = vmul.f32 %v1621, %v1620
    %v1623 = vmul.f32 0.5, %v1622
    %v1624 = vsub.f32 1.5, %v1623
    %v1625 = vmul.f32 %v1620, %v1624
    %vm1626 = vweird.f32 %v1616
    %vm1627 = vweird.f32 %v1620
    %vm1628 = vmor %vm1626, %vm1627
    %v1629 = vsel %vm1628, %v1620, %v1625
    %v1630 = vrsqrt.pop %v1617
    %v1631 = vmul.f32 %v1630, %v1617
    %v1632 = vmul.f32 %v1631, %v1630
    %v1633 = vmul.f32 0.5, %v1632
    %v1634 = vsub.f32 1.5, %v1633
    %v1635 = vmul.f32 %v1630, %v1634
    %vm1636 = vweird.f32 %v1617
    %vm1637 = vweird.f32 %v1630
    %vm1638 = vmor %vm1636, %vm1637
    %v1639 = vsel %vm1638, %v1630, %v1635
    %v1640 = vrsqrt.pop %v1618
    %v1641 = vmul.f32 %v1640, %v1618
    %v1642 = vmul.f32 %v1641, %v1640
    %v1643 = vmul.f32 0.5, %v1642
    %v1644 = vsub.f32 1.5, %v1643
    %v1645 = vmul.f32 %v1640, %v1644
    %vm1646 = vweird.f32 %v1618
    %vm1647 = vweird.f32 %v1640
    %vm1648 = vmor %vm1646, %vm1647
    %v1649 = vsel %vm1648, %v1640, %v1645
    %v1650 = vrsqrt.pop %v1619
    %v1651 = vmul.f32 %v1650, %v1619
    %v1652 = vmul.f32 %v1651, %v1650
    %v1653 = vmul.f32 0.5, %v1652
    %v1654 = vsub.f32 1.5, %v1653
    %v1655 = vmul.f32 %v1650, %v1654
    %vm1656 = vweird.f32 %v1619
    %vm1657 = vweird.f32 %v1650
    %vm1658 = vmor %vm1656, %vm1657
    %v1659 = vsel %vm1658, %v1650, %v1655
    %v1660 = vmul.f32 %v85, %v1629
    %v1661 = vmul.f32 %v86, %v1639
    %v1662 = vmul.f32 %v87, %v1649
    %v1663 = vmul.f32 %v88, %v1659
    %v1664 = vmul.f32 %v1568, %v1660
    %v1665 = vmul.f32 %v1569, %v1661
    %v1666 = vmul.f32 %v1570, %v1662
    %v1667 = vmul.f32 %v1571, %v1663
    %v1672 = vrot.slane %v1664, 7
    %v1673 = vrot.slane %v1665, 7
    %v1674 = vrot.slane %v1666, 7
    %v1675 = vrot.slane %v1667, 7
    %v1680 = vsub.f32 %v85, %v1672
    %v1681 = vsub.f32 %v86, %v1673
    %v1682 = vsub.f32 %v87, %v1674
    %v1683 = vsub.f32 %v88, %v1675
    %v1684 = vperm.slane %v1660, 4
    %v1685 = vperm.slane %v1661, 4
    %v1686 = vperm.slane %v1662, 4
    %v1687 = vperm.slane %v1663, 4
    %v1688 = vmul.f32 %v1385, %v1684
    %v1689 = vmul.f32 %v1437, %v1685
    %v1690 = vmul.f32 %v1489, %v1686
    %v1691 = vmul.f32 %v1541, %v1687
    %v1692 = vperm.slane %v1680, 5
    %v1693 = vperm.slane %v1681, 5
    %v1694 = vperm.slane %v1682, 5
    %v1695 = vperm.slane %v1683, 5
    %v1696 = vadd.f32 %v1688, %v1692
    %v1697 = vadd.f32 %v1689, %v1693
    %v1698 = vadd.f32 %v1690, %v1694
    %v1699 = vadd.f32 %v1691, %v1695
    %v1700 = vmax.f32 %v1696, 0.0
    %v1701 = vmax.f32 %v1697, 0.0
    %v1702 = vmax.f32 %v1698, 0.0
    %v1703 = vmax.f32 %v1699, 0.0
    %v1704 = vpack.c.bf16 %v1700, %v1700
    %v1705 = vpack.c.bf16 %v1701, %v1701
    %v1706 = vpack.c.bf16 %v1702, %v1702
    %v1707 = vpack.c.bf16 %v1703, %v1703
    %v1708 = vld [vmem:[#allocation7] sm:$0xf]
    %v1709 = vld [vmem:[#allocation7 + $0x4] sm:$0xf]
    %v1710 = vld [vmem:[#allocation7 + $0x8] sm:$0xf]
    %v1711 = vld [vmem:[#allocation7 + $0xc] sm:$0xf]
    %v1712 = vld [vmem:[#allocation7 + $0x10] sm:$0xf]
    %v1713 = vld [vmem:[#allocation7 + $0x14] sm:$0xf]
    %v1714 = vld [vmem:[#allocation7 + $0x18] sm:$0xf]
    %v1715 = vld [vmem:[#allocation7 + $0x1c] sm:$0xf]
    %v1716 = vld [vmem:[#allocation7 + $0x20] sm:$0xf]
    %v1717 = vld [vmem:[#allocation7 + $0x24] sm:$0xf]
    %v1718 = vld [vmem:[#allocation7 + $0x28] sm:$0xf]
    %v1719 = vld [vmem:[#allocation7 + $0x2c] sm:$0xf]
    %v1720 = vld [vmem:[#allocation7 + $0x30] sm:$0xf]
    %v1721 = vld [vmem:[#allocation7 + $0x34] sm:$0xf]
    %v1722 = vld [vmem:[#allocation7 + $0x38] sm:$0xf]
    %v1723 = vld [vmem:[#allocation7 + $0x3c] sm:$0xf]
    %v1724 = vld [vmem:[#allocation7 + $0x40] sm:$0xf]
    %v1725 = vld [vmem:[#allocation7 + $0x44] sm:$0xf]
    %v1726 = vld [vmem:[#allocation7 + $0x48] sm:$0xf]
    %v1727 = vld [vmem:[#allocation7 + $0x4c] sm:$0xf]
    %v1728 = vld [vmem:[#allocation7 + $0x50] sm:$0xf]
    %v1729 = vld [vmem:[#allocation7 + $0x54] sm:$0xf]
    %v1730 = vld [vmem:[#allocation7 + $0x58] sm:$0xf]
    %v1731 = vld [vmem:[#allocation7 + $0x5c] sm:$0xf]
    %v1732 = vld [vmem:[#allocation7 + $0x60] sm:$0xf]
    %v1733 = vld [vmem:[#allocation7 + $0x64] sm:$0xf]
    %v1734 = vld [vmem:[#allocation7 + $0x68] sm:$0xf]
    %v1735 = vld [vmem:[#allocation7 + $0x6c] sm:$0xf]
    %v1736 = vld [vmem:[#allocation7 + $0x70] sm:$0xf]
    %v1737 = vld [vmem:[#allocation7 + $0x74] sm:$0xf]
    %v1738 = vld [vmem:[#allocation7 + $0x78] sm:$0xf]
    %v1739 = vld [vmem:[#allocation7 + $0x7c] sm:$0xf]
    %v1740 = vld [vmem:[#allocation7 + $0x80] sm:$0xf]
    %v1741 = vld [vmem:[#allocation7 + $0x84] sm:$0xf]
    %v1742 = vld [vmem:[#allocation7 + $0x88] sm:$0xf]
    %v1743 = vld [vmem:[#allocation7 + $0x8c] sm:$0xf]
    %v1744 = vld [vmem:[#allocation7 + $0x90] sm:$0xf]
    %v1745 = vld [vmem:[#allocation7 + $0x94] sm:$0xf]
    %v1746 = vld [vmem:[#allocation7 + $0x98] sm:$0xf]
    %v1747 = vld [vmem:[#allocation7 + $0x9c] sm:$0xf]
    %v1748 = vld [vmem:[#allocation7 + $0xa0] sm:$0xf]
    %v1749 = vld [vmem:[#allocation7 + $0xa4] sm:$0xf]
    %v1750 = vld [vmem:[#allocation7 + $0xa8] sm:$0xf]
    %v1751 = vld [vmem:[#allocation7 + $0xac] sm:$0xf]
    %v1752 = vld [vmem:[#allocation7 + $0xb0] sm:$0xf]
    %v1753 = vld [vmem:[#allocation7 + $0xb4] sm:$0xf]
    %v1754 = vld [vmem:[#allocation7 + $0xb8] sm:$0xf]
    %v1755 = vld [vmem:[#allocation7 + $0xbc] sm:$0xf]
    %v1756 = vld [vmem:[#allocation7 + $0xc0] sm:$0xf]
    %v1757 = vld [vmem:[#allocation7 + $0xc4] sm:$0xf]
    %v1758 = vld [vmem:[#allocation7 + $0xc8] sm:$0xf]
    %v1759 = vld [vmem:[#allocation7 + $0xcc] sm:$0xf]
    %v1760 = vld [vmem:[#allocation7 + $0xd0] sm:$0xf]
    %v1761 = vld [vmem:[#allocation7 + $0xd4] sm:$0xf]
    %v1762 = vld [vmem:[#allocation7 + $0xd8] sm:$0xf]
    %v1763 = vld [vmem:[#allocation7 + $0xdc] sm:$0xf]
    %v1764 = vld [vmem:[#allocation7 + $0xe0] sm:$0xf]
    %v1765 = vld [vmem:[#allocation7 + $0xe4] sm:$0xf]
    %v1766 = vld [vmem:[#allocation7 + $0xe8] sm:$0xf]
    %v1767 = vld [vmem:[#allocation7 + $0xec] sm:$0xf]
    %v1768 = vld [vmem:[#allocation7 + $0xf0] sm:$0xf]
    %v1769 = vld [vmem:[#allocation7 + $0xf4] sm:$0xf]
    %v1770 = vld [vmem:[#allocation7 + $0xf8] sm:$0xf]
    %v1771 = vld [vmem:[#allocation7 + $0xfc] sm:$0xf]
    %v1772 = vperm.slane %v85, 6
    %v1837 = vunpack.c.l.b16 %v1708
    %v1838 = vunpack.c.l.b16 %v1709
    %v1839 = vunpack.c.l.b16 %v1710
    %v1840 = vunpack.c.l.b16 %v1711
    %v1841 = vunpack.c.l.b16 %v1712
    %v1842 = vunpack.c.l.b16 %v1713
    %v1843 = vunpack.c.l.b16 %v1714
    %v1844 = vunpack.c.l.b16 %v1715
    %v1845 = vunpack.c.l.b16 %v1716
    %v1846 = vunpack.c.l.b16 %v1717
    %v1847 = vunpack.c.l.b16 %v1718
    %v1848 = vunpack.c.l.b16 %v1719
    %v1849 = vunpack.c.l.b16 %v1720
    %v1850 = vunpack.c.l.b16 %v1721
    %v1851 = vunpack.c.l.b16 %v1722
    %v1852 = vunpack.c.l.b16 %v1723
    %v1853 = vunpack.c.l.b16 %v1724
    %v1854 = vunpack.c.l.b16 %v1725
    %v1855 = vunpack.c.l.b16 %v1726
    %v1856 = vunpack.c.l.b16 %v1727
    %v1857 = vunpack.c.l.b16 %v1728
    %v1858 = vunpack.c.l.b16 %v1729
    %v1859 = vunpack.c.l.b16 %v1730
    %v1860 = vunpack.c.l.b16 %v1731
    %v1861 = vunpack.c.l.b16 %v1732
    %v1862 = vunpack.c.l.b16 %v1733
    %v1863 = vunpack.c.l.b16 %v1734
    %v1864 = vunpack.c.l.b16 %v1735
    %v1865 = vunpack.c.l.b16 %v1736
    %v1866 = vunpack.c.l.b16 %v1737
    %v1867 = vunpack.c.l.b16 %v1738
    %v1868 = vunpack.c.l.b16 %v1739
    %v1869 = vunpack.c.l.b16 %v1740
    %v1870 = vunpack.c.l.b16 %v1741
    %v1871 = vunpack.c.l.b16 %v1742
    %v1872 = vunpack.c.l.b16 %v1743
    %v1873 = vunpack.c.l.b16 %v1744
    %v1874 = vunpack.c.l.b16 %v1745
    %v1875 = vunpack.c.l.b16 %v1746
    %v1876 = vunpack.c.l.b16 %v1747
    %v1877 = vunpack.c.l.b16 %v1748
    %v1878 = vunpack.c.l.b16 %v1749
    %v1879 = vunpack.c.l.b16 %v1750
    %v1880 = vunpack.c.l.b16 %v1751
    %v1881 = vunpack.c.l.b16 %v1752
    %v1882 = vunpack.c.l.b16 %v1753
    %v1883 = vunpack.c.l.b16 %v1754
    %v1884 = vunpack.c.l.b16 %v1755
    %v1885 = vunpack.c.l.b16 %v1756
    %v1886 = vunpack.c.l.b16 %v1757
    %v1887 = vunpack.c.l.b16 %v1758
    %v1888 = vunpack.c.l.b16 %v1759
    %v1889 = vunpack.c.l.b16 %v1760
    %v1890 = vunpack.c.l.b16 %v1761
    %v1891 = vunpack.c.l.b16 %v1762
    %v1892 = vunpack.c.l.b16 %v1763
    %v1893 = vunpack.c.l.b16 %v1764
    %v1894 = vunpack.c.l.b16 %v1765
    %v1895 = vunpack.c.l.b16 %v1766
    %v1896 = vunpack.c.l.b16 %v1767
    %v1897 = vunpack.c.l.b16 %v1768
    %v1898 = vunpack.c.l.b16 %v1769
    %v1899 = vunpack.c.l.b16 %v1770
    %v1900 = vunpack.c.l.b16 %v1771
    %v1901 = vpack.c.b16 %v1838, %v1837
    %v1902 = vpack.c.b16 %v1840, %v1839
    %v1903 = vpack.c.b16 %v1842, %v1841
    %v1904 = vpack.c.b16 %v1844, %v1843
    %v1905 = vpack.c.b16 %v1846, %v1845
    %v1906 = vpack.c.b16 %v1848, %v1847
    %v1907 = vpack.c.b16 %v1850, %v1849
    %v1908 = vpack.c.b16 %v1852, %v1851
    %v1909 = vpack.c.b16 %v1854, %v1853
    %v1910 = vpack.c.b16 %v1856, %v1855
    %v1911 = vpack.c.b16 %v1858, %v1857
    %v1912 = vpack.c.b16 %v1860, %v1859
    %v1913 = vpack.c.b16 %v1862, %v1861
    %v1914 = vpack.c.b16 %v1864, %v1863
    %v1915 = vpack.c.b16 %v1866, %v1865
    %v1916 = vpack.c.b16 %v1868, %v1867
    %v1917 = vpack.c.b16 %v1870, %v1869
    %v1918 = vpack.c.b16 %v1872, %v1871
    %v1919 = vpack.c.b16 %v1874, %v1873
    %v1920 = vpack.c.b16 %v1876, %v1875
    %v1921 = vpack.c.b16 %v1878, %v1877
    %v1922 = vpack.c.b16 %v1880, %v1879
    %v1923 = vpack.c.b16 %v1882, %v1881
    %v1924 = vpack.c.b16 %v1884, %v1883
    %v1925 = vpack.c.b16 %v1886, %v1885
    %v1926 = vpack.c.b16 %v1888, %v1887
    %v1927 = vpack.c.b16 %v1890, %v1889
    %v1928 = vpack.c.b16 %v1892, %v1891
    %v1929 = vpack.c.b16 %v1894, %v1893
    %v1930 = vpack.c.b16 %v1896, %v1895
    %v1931 = vpack.c.b16 %v1898, %v1897
    %v1932 = vpack.c.b16 %v1900, %v1899
    %1965 = vmatpush.bf16.msra.mxu0 %v1908
    %1966 = vmatpush.bf16.msra.mxu0 %v1907
    %1967 = vmatpush.bf16.msra.mxu0 %v1906
    %1968 = vmatpush.bf16.msra.mxu0 %v1905
    %1969 = vmatpush.bf16.msra.mxu0 %v1904
    %1970 = vmatpush.bf16.msra.mxu0 %v1903
    %1971 = vmatpush.bf16.msra.mxu0 %v1902
    %1972 = vmatpush.bf16.msra.mxu0 %v1901
    %1973 = vmatmul.bf16.gmra.mxu0 %v1704
    %v1974 = vpop.f32.mrf.mxu0
    %v1975 = vadd.f32 %v1772, %v1974
    %v1976 = vpop.f32.mrf.mxu0
    %1977 = vdwg.mxu0
    %1978 = vmatpush.bf16.msra.mxu0 %v1916
    %1979 = vmatpush.bf16.msra.mxu0 %v1915
    %1980 = vmatpush.bf16.msra.mxu0 %v1914
    %1981 = vmatpush.bf16.msra.mxu0 %v1913
    %1982 = vmatpush.bf16.msra.mxu0 %v1912
    %1983 = vmatpush.bf16.msra.mxu0 %v1911
    %1984 = vmatpush.bf16.msra.mxu0 %v1910
    %1985 = vmatpush.bf16.msra.mxu0 %v1909
    %1986 = vmatmul.bf16.gmra.mxu0 %v1705
    %v1987 = vpop.f32.mrf.mxu0
    %v1988 = vadd.f32 %v1975, %v1987
    %v1989 = vpop.f32.mrf.mxu0
    %1990 = vdwg.mxu0
    %1991 = vmatpush.bf16.msra.mxu0 %v1924
    %1992 = vmatpush.bf16.msra.mxu0 %v1923
    %1993 = vmatpush.bf16.msra.mxu0 %v1922
    %1994 = vmatpush.bf16.msra.mxu0 %v1921
    %1995 = vmatpush.bf16.msra.mxu0 %v1920
    %1996 = vmatpush.bf16.msra.mxu0 %v1919
    %1997 = vmatpush.bf16.msra.mxu0 %v1918
    %1998 = vmatpush.bf16.msra.mxu0 %v1917
    %1999 = vmatmul.bf16.gmra.mxu0 %v1706
    %v2000 = vpop.f32.mrf.mxu0
    %v2001 = vadd.f32 %v1988, %v2000
    %v2002 = vpop.f32.mrf.mxu0
    %2003 = vdwg.mxu0
    %2004 = vmatpush.bf16.msra.mxu0 %v1932
    %2005 = vmatpush.bf16.msra.mxu0 %v1931
    %2006 = vmatpush.bf16.msra.mxu0 %v1930
    %2007 = vmatpush.bf16.msra.mxu0 %v1929
    %2008 = vmatpush.bf16.msra.mxu0 %v1928
    %2009 = vmatpush.bf16.msra.mxu0 %v1927
    %2010 = vmatpush.bf16.msra.mxu0 %v1926
    %2011 = vmatpush.bf16.msra.mxu0 %v1925
    %2012 = vmatmul.bf16.gmra.mxu0 %v1707
    %v2013 = vpop.f32.mrf.mxu0
    %v2014 = vadd.f32 %v2001, %v2013
    %v2015 = vpop.f32.mrf.mxu0
    %2016 = vdwg.mxu0
    %v2017 = vpack.c.bf16 %v2014, %v2014
    %2018 = vst [vmem:[#allocation10] sm:$0xf] %v2017
    // Predicated region
    $region42: #{tpu_custom_call.1} parent=1 // pred_check
      _
    $region43: #{tpu_custom_call.1} parent=1 // pred_check_branch
      %2020 = sbr.rel (0) target = $region45
    $region44: #{tpu_custom_call.1} parent=1 // pred_region
      %2022 = vsyncadd [#allocation4], 0
      %s2024 = sshll.u32 [#allocation10], 4
      %s2025 = int_to_ptr.vmem [resolvable:$true] %s2024
      %s2026 = sshll.u32 %s6, 4
      %s2027 = int_to_ptr.hbm [resolvable:$true] %s2026
      %2029 = dma.vmem_to_hbm [thread:$0]  %s2025, 64, %s2027, [#allocation4]
    $region45: #{tpu_custom_call.1} parent=1 // pred_fallthru
      _
    // Predicated region
    $region46: #{tpu_custom_call.1} parent=1 // pred_check
      _
    $region47: #{tpu_custom_call.1} parent=1 // pred_check_branch
      %2031 = sbr.rel (0) target = $region49
    $region48: #{tpu_custom_call.1} parent=1 // pred_region
      %2033 = dma.done [#allocation4], 64
    $region49: #{tpu_custom_call.1} parent=1 // pred_fallthru
      _
    %2034 = vsyncpa [#allocation3], 1
    %2035 = vsyncpa [#allocation6], 1
    %2036 = vsyncpa [#allocation9], 1
    %2037 = vsyncpa [#allocation4], 1

</llo_original>
